<compile_context>
chip_gen: v5e
topology: v5e:2x2
jax: 0.10.0
libtpu: 0.0.40
codegen_flags: <defaults>
</compile_context>

<pallas_src>
import functools

import jax
import jax.numpy as jnp
from jax import lax
from jax.experimental import pallas as pl
from jax.experimental.pallas import tpu as pltpu


# ----------------------------- chip-aware caps ------------------------------

def _chip_caps():
    """(scoped-VMEM cap, max N-tile): larger on 128-MiB-VMEM chips (v5e/v6e),
    conservative on v7x (64 MiB physical) or when the query fails."""
    try:
        vmem = pltpu.get_tpu_info().vmem_capacity_bytes
    except Exception:                                   # safe fallback
        return 32 * 1024 * 1024, 1024
    if vmem <= 64 * 1024 * 1024:                        # v7x-class
        return 32 * 1024 * 1024, 1024
    return 64 * 1024 * 1024, 2048                       # v5e / v6e


def _pick_n_tile(n, base, max_tile):
    """Largest divisor of n that is a multiple of `base` and <= max_tile,
    preferring lane-dense multiples of 128; falls back to n (single tile)."""
    # TODO(synk): for N with no suitable divisor, switch to a cdiv grid with a
    # masked last tile instead of falling back to tn=N.
    best_any, best_128 = None, None
    t = base
    lim = min(n, max_tile)
    while t <= lim:
        if n % t == 0:
            best_any = t
            if t % 128 == 0:
                best_128 = t
        t += base
    return best_128 or best_any or n


# ----------------------------- Pallas kernels ------------------------------

def _phi_g_m_kernel(x_ref, w_pg_ref, b_pg_ref, m_ref, *, Ci, W, np_total, pooled):
    """Fused phi/g conv + in-register (1,2,2) max-pool + M accumulation.

    x_ref: (C, tn) f32 tile (tn multiple of 2*W, tile aligned to row pairs).
    w_pg_ref: (2Ci, C) matmul-dtype; b_pg_ref: (2Ci, 1) f32.
    m_ref: (Ci, Ci) f32 output block, resident across the N grid axis.
    """
    n = pl.program_id(1)

    @pl.when(n == 0)
    def _():
        m_ref[...] = jnp.zeros_like(m_ref)

    xm = x_ref[...].astype(w_pg_ref.dtype)                              # (C, tn)
    pg = (jnp.dot(w_pg_ref[...], xm, preferred_element_type=jnp.float32)
          + b_pg_ref[...])                                              # (2Ci, tn) f32

    if pooled:
        # 2x2 spatial max-pool along the lane (N) axis via XLU rolls.
        # pooled[l] = max(x[l], x[l+1], x[l+W], x[l+W+1]); valid at anchors
        # (h even, w even).  Positive shifts tn-1 / tn-W == -1 / -W (mod tn).
        tn = pg.shape[-1]
        a = jnp.maximum(pg, pltpu.roll(pg, shift=tn - 1, axis=1))
        pg = jnp.maximum(a, pltpu.roll(a, shift=tn - W, axis=1))

    phi = pg[:Ci]                                                       # (Ci, tn)
    g = pg[Ci:]                                                         # (Ci, tn)

    if pooled:
        # Zero non-anchor columns of g: the outer-product sum then counts each
        # pooled position exactly once (no lane compaction required).
        lane = lax.broadcasted_iota(jnp.int32, g.shape, 1)
        anchor = ((lane % 2) == 0) & (((lane // W) % 2) == 0)
        g = jnp.where(anchor, g, 0.0)

    m_ref[...] += lax.dot_general(
        phi.astype(w_pg_ref.dtype), g.astype(w_pg_ref.dtype),
        (((1,), (1,)), ((), ())), preferred_element_type=jnp.float32)   # (Ci, Ci)

    @pl.when(n == pl.num_programs(1) - 1)
    def _():
        m_ref[...] = m_ref[...] * (1.0 / np_total)


def _attn_fast_kernel(x_ref, wth_ref, bth_ref, m_ref, ww_ref, shift_ref, z_ref):
    """Reassociated attention: theta recomputed from x, y^T = M^T @ theta^T."""
    x = x_ref[...]                                                      # (C, tn) f32
    xm = x.astype(wth_ref.dtype)
    th = (jnp.dot(wth_ref[...], xm, preferred_element_type=jnp.float32)
          + bth_ref[...]).astype(m_ref.dtype)                           # (Ci, tn)
    y = lax.dot_general(m_ref[...], th, (((0,), (0,)), ((), ())),
                        preferred_element_type=jnp.float32)             # (Ci, tn)
    wy = jnp.dot(ww_ref[...], y.astype(ww_ref.dtype),
                 preferred_element_type=jnp.float32)                    # (C, tn)
    z_ref[...] = (wy + shift_ref[...] + x).astype(z_ref.dtype)


def _phi_g_kernel(x_ref, w_pg_ref, b_pg_ref, phi_ref, g_ref):
    """Map-path conv: phi and g emitted as two separate lane-dense outputs."""
    xm = x_ref[...].astype(w_pg_ref.dtype)
    pg = (jnp.dot(w_pg_ref[...], xm, preferred_element_type=jnp.float32)
          + b_pg_ref[...])                                              # (2Ci, tn)
    Ci = phi_ref.shape[0]
    phi_ref[...] = pg[:Ci].astype(phi_ref.dtype)
    g_ref[...] = pg[Ci:].astype(g_ref.dtype)


def _attn_map_kernel(x_ref, wth_ref, bth_ref, phi_ref, g_ref, ww_ref, shift_ref,
                     z_ref, f_ref, theta_s, y_acc, *, inv_np):
    """Map-path attention, tiled over Np (reduction axis, last grid dim)."""
    p = pl.program_id(2)

    @pl.when(p == 0)
    def _():
        xm = x_ref[...].astype(wth_ref.dtype)
        theta_s[...] = (jnp.dot(wth_ref[...], xm,
                                preferred_element_type=jnp.float32)
                        + bth_ref[...]).astype(theta_s.dtype)           # (Ci, tn)
        y_acc[...] = jnp.zeros_like(y_acc)

    th = theta_s[...]
    f = lax.dot_general(th, phi_ref[...], (((0,), (0,)), ((), ())),
                        preferred_element_type=jnp.float32)             # (tn, tp)
    f_div = f * inv_np
    # TODO(synk): emit f_div in bf16 on v7x to halve the dominant HBM write.
    f_ref[...] = f_div.astype(f_ref.dtype)
    y_acc[...] += lax.dot_general(g_ref[...], f_div.astype(g_ref.dtype),
                                  (((1,), (1,)), ((), ())),
                                  preferred_element_type=jnp.float32)   # (Ci, tn)

    @pl.when(p == pl.num_programs(2) - 1)
    def _():
        wy = jnp.dot(ww_ref[...], y_acc[...].astype(ww_ref.dtype),
                     preferred_element_type=jnp.float32)                # (C, tn)
        z_ref[...] = (wy + shift_ref[...] + x_ref[...]).astype(z_ref.dtype)


# ------------------------------ pallas_call wrappers ------------------------

def phi_g_m_call(x3d, w_pg, b_pg, Ci, W, np_total, pooled, tn, vmem_limit):
    B, C, N = x3d.shape
    nt = N // tn
    kernel = functools.partial(_phi_g_m_kernel, Ci=Ci, W=W,
                               np_total=np_total, pooled=pooled)
    return pl.pallas_call(
        kernel,
        out_shape=jax.ShapeDtypeStruct((B, Ci, Ci), jnp.float32),
        grid=(B, nt),
        in_specs=[pl.BlockSpec((None, C, tn), lambda b, n: (b, 0, n)),
                  pl.BlockSpec((2 * Ci, C), lambda b, n: (0, 0)),
                  pl.BlockSpec((2 * Ci, 1), lambda b, n: (0, 0))],
        out_specs=pl.BlockSpec((None, Ci, Ci), lambda b, n: (b, 0, 0)),
        compiler_params=pltpu.CompilerParams(
            dimension_semantics=("parallel", "arbitrary"),
            vmem_limit_bytes=vmem_limit),
    )(x3d, w_pg, b_pg)


def attn_fast_call(x3d, w_theta_t, b_theta, m_md, ww_scaled, shift_eff, tn,
                   vmem_limit):
    B, C, N = x3d.shape
    Ci = w_theta_t.shape[0]
    nt = N // tn
    return pl.pallas_call(
        _attn_fast_kernel,
        out_shape=jax.ShapeDtypeStruct((B, C, N), jnp.float32),
        grid=(B, nt),
        in_specs=[pl.BlockSpec((None, C, tn), lambda b, n: (b, 0, n)),
                  pl.BlockSpec((Ci, C), lambda b, n: (0, 0)),
                  pl.BlockSpec((Ci, 1), lambda b, n: (0, 0)),
                  pl.BlockSpec((None, Ci, Ci), lambda b, n: (b, 0, 0)),
                  pl.BlockSpec((C, Ci), lambda b, n: (0, 0)),
                  pl.BlockSpec((C, 1), lambda b, n: (0, 0))],
        out_specs=pl.BlockSpec((None, C, tn), lambda b, n: (b, 0, n)),
        compiler_params=pltpu.CompilerParams(
            dimension_semantics=("parallel", "parallel"),
            vmem_limit_bytes=vmem_limit),
    )(x3d, w_theta_t, b_theta, m_md, ww_scaled, shift_eff)


def phi_g_call(x3d, w_pg, b_pg, out_dtype, tn, vmem_limit):
    B, C, N = x3d.shape
    Ci2 = w_pg.shape[0]
    Ci = Ci2 // 2
    nt = N // tn
    return pl.pallas_call(
        _phi_g_kernel,
        out_shape=(jax.ShapeDtypeStruct((B, Ci, N), out_dtype),
                   jax.ShapeDtypeStruct((B, Ci, N), out_dtype)),
        grid=(B, nt),
        in_specs=[pl.BlockSpec((None, C, tn), lambda b, n: (b, 0, n)),
                  pl.BlockSpec((Ci2, C), lambda b, n: (0, 0)),
                  pl.BlockSpec((Ci2, 1), lambda b, n: (0, 0))],
        out_specs=(pl.BlockSpec((None, Ci, tn), lambda b, n: (b, 0, n)),
                   pl.BlockSpec((None, Ci, tn), lambda b, n: (b, 0, n))),
        compiler_params=pltpu.CompilerParams(
            dimension_semantics=("parallel", "parallel"),
            vmem_limit_bytes=vmem_limit),
    )(x3d, w_pg, b_pg)


def attn_map_call(x3d, w_theta_t, b_theta, phi_p, g_p, ww_scaled, shift_eff,
                  tn, max_tile, vmem_limit):
    B, C, N = x3d.shape
    Ci = w_theta_t.shape[0]
    Np = phi_p.shape[-1]
    nt = N // tn
    tp = _pick_n_tile(Np, base=1, max_tile=max_tile)
    npt = Np // tp
    md = phi_p.dtype
    kernel = functools.partial(_attn_map_kernel, inv_np=1.0 / Np)
    return pl.pallas_call(
        kernel,
        out_shape=(jax.ShapeDtypeStruct((B, C, N), jnp.float32),
                   jax.ShapeDtypeStruct((B, N, Np), jnp.float32)),
        grid=(B, nt, npt),
        in_specs=[pl.BlockSpec((None, C, tn), lambda b, n, p: (b, 0, n)),
                  pl.BlockSpec((Ci, C), lambda b, n, p: (0, 0)),
                  pl.BlockSpec((Ci, 1), lambda b, n, p: (0, 0)),
                  pl.BlockSpec((None, Ci, tp), lambda b, n, p: (b, 0, p)),
                  pl.BlockSpec((None, Ci, tp), lambda b, n, p: (b, 0, p)),
                  pl.BlockSpec((C, Ci), lambda b, n, p: (0, 0)),
                  pl.BlockSpec((C, 1), lambda b, n, p: (0, 0))],
        out_specs=(pl.BlockSpec((None, C, tn), lambda b, n, p: (b, 0, n)),
                   pl.BlockSpec((None, tn, tp), lambda b, n, p: (b, n, p))),
        scratch_shapes=[pltpu.VMEM((Ci, tn), md),
                        pltpu.VMEM((Ci, tn), jnp.float32)],
        compiler_params=pltpu.CompilerParams(
            dimension_semantics=("parallel", "parallel", "arbitrary"),
            vmem_limit_bytes=vmem_limit),
    )(x3d, w_theta_t, b_theta, phi_p, g_p, ww_scaled, shift_eff)


# ------------------------------ glue ---------------------------------------

def _maxpool_122_cf(t, B, T, H, W):
    """Channels-first (B, Ci, T*H*W) -> MaxPool3d(1,2,2) -> (B, Ci, T*(H//2)*(W//2))."""
    Ci = t.shape[1]
    t = t.reshape(B, Ci, T, H // 2, 2, W // 2, 2)
    t = jnp.max(t, axis=(4, 6))
    return t.reshape(B, Ci, T * (H // 2) * (W // 2))


def non_local_block_forward(x, params, *, sub_sample=True, return_nl_map=False,
                            matmul_dtype=jnp.float32):
    """x: (B, C, T, H, W) float32 — same layout as the PyTorch module."""
    B, C, T, H, W = x.shape
    N = T * H * W
    Ci = params["w_theta"].shape[1]
    md = matmul_dtype
    vmem_limit, max_tile = _chip_caps()

    x3d = x.reshape(B, C, N)                       # channels-first, no transpose

    # Fold inference-mode BatchNorm + W-conv bias into per-channel weight/shift.
    inv_std = 1.0 / jnp.sqrt(params["bn_var"] + params["bn_eps"])
    scale = (params["bn_gamma"] * inv_std)[:, None]                              # (C,1)
    shift_bn = (params["bn_beta"]
                - params["bn_mean"] * params["bn_gamma"] * inv_std)[:, None]
    shift_eff = (params["b_w"].T * scale + shift_bn).astype(jnp.float32)          # (C,1)
    ww_scaled = (scale * params["w_w"].T).astype(md)                              # (C,Ci)

    w_theta_t = params["w_theta"].T.astype(md)                                    # (Ci,C)
    b_theta_cf = params["b_theta"].T.astype(jnp.float32)                          # (Ci,1)
    w_pg = jnp.concatenate([params["w_phi"].T, params["w_g"].T], axis=0).astype(md)     # (2Ci,C)
    b_pg = jnp.concatenate([params["b_phi"], params["b_g"]], axis=1).T.astype(jnp.float32)  # (2Ci,1)

    # Pool windows must not straddle tile boundaries -> tn multiple of 2*W.
    base = 2 * W if sub_sample else 1
    tn = _pick_n_tile(N, base=base, max_tile=max_tile)

    if return_nl_map:
        phi_full, g_full = phi_g_call(x3d, w_pg, b_pg, md, tn, vmem_limit)        # (B,Ci,N) x2
        if sub_sample:
            # TODO(synk): small O(N*Ci) pool left in JAX glue on this path; the
            # dominant HBM cost here is the (B,N,Np) similarity-map write.
            phi_p = _maxpool_122_cf(phi_full, B, T, H, W)
            g_p = _maxpool_122_cf(g_full, B, T, H, W)
        else:
            phi_p, g_p = phi_full, g_full
        z3d, f_div = attn_map_call(x3d, w_theta_t, b_theta_cf, phi_p, g_p,
                                   ww_scaled, shift_eff, tn, max_tile, vmem_limit)
        return z3d.reshape(B, C, T, H, W), f_div

    # Fast path: two fused kernels, no intermediate activations in HBM.
    np_total = T * (H // 2) * (W // 2) if sub_sample else N
    m = phi_g_m_call(x3d, w_pg, b_pg, Ci, W, np_total, sub_sample, tn, vmem_limit)  # (B,Ci,Ci)
    z3d = attn_fast_call(x3d, w_theta_t, b_theta_cf, m.astype(md), ww_scaled,
                         shift_eff, tn, vmem_limit)
    return z3d.reshape(B, C, T, H, W)


# ------------------------------ pure-JAX reference ---------------------------

def _maxpool_122_nlc(t2d, B, T, H, W):
    Ci = t2d.shape[-1]
    t = t2d.reshape(B, T, H // 2, 2, W // 2, 2, Ci)
    t = jnp.max(t, axis=(3, 5))
    return t.reshape(B, T * (H // 2) * (W // 2), Ci)


def reference_forward(x, params, sub_sample=True):
    B, C, T, H, W = x.shape
    N = T * H * W
    x2d = jnp.transpose(x, (0, 2, 3, 4, 1)).reshape(B, N, C)
    theta = x2d @ params["w_theta"] + params["b_theta"]
    phi = x2d @ params["w_phi"] + params["b_phi"]
    g = x2d @ params["w_g"] + params["b_g"]
    if sub_sample:
        phi = _maxpool_122_nlc(phi, B, T, H, W)
        g = _maxpool_122_nlc(g, B, T, H, W)
    f = jnp.einsum("bnc,bmc->bnm", theta, phi)
    f_div = f / f.shape[-1]
    y = jnp.einsum("bnm,bmc->bnc", f_div, g)
    wy = y @ params["w_w"] + params["b_w"]
    inv_std = 1.0 / jnp.sqrt(params["bn_var"] + params["bn_eps"])
    wy = (wy - params["bn_mean"]) * inv_std * params["bn_gamma"] + params["bn_beta"]
    z2d = wy + x2d
    z = jnp.transpose(z2d.reshape(B, T, H, W, C), (0, 4, 1, 2, 3))
    return z, f_div


# ------------------------------ main -----------------------------------------

if __name__ == "__main__":
    B, C, T, H, W = 2, 8, 2, 8, 8          # (b, c, t, h, w)
    Ci = C // 2                            # inter_channels = in_channels // 2
    N, Np = T * H * W, T * (H // 2) * (W // 2)

    key = jax.random.PRNGKey(0)
    ks = jax.random.split(key, 12)
    params = {
        # torch conv weights are (C_out, C_in, 1,1,1); stored transposed (C_in, C_out)
        "w_theta": jax.random.normal(ks[0], (C, Ci), jnp.float32) * 0.2,
        "b_theta": jax.random.normal(ks[1], (1, Ci), jnp.float32) * 0.1,
        "w_phi":   jax.random.normal(ks[2], (C, Ci), jnp.float32) * 0.2,
        "b_phi":   jax.random.normal(ks[3], (1, Ci), jnp.float32) * 0.1,
        "w_g":     jax.random.normal(ks[4], (C, Ci), jnp.float32) * 0.2,
        "b_g":     jax.random.normal(ks[5], (1, Ci), jnp.float32) * 0.1,
        "w_w":     jax.random.normal(ks[6], (Ci, C), jnp.float32) * 0.2,
        "b_w":     jax.random.normal(ks[7], (1, C), jnp.float32) * 0.1,
        # BatchNorm (inference mode).  PyTorch zero-inits gamma/beta; nonzero
        # deterministic values used here so the non-local path is exercised.
        "bn_gamma": jax.random.normal(ks[8], (C,), jnp.float32) * 0.5 + 1.0,
        "bn_beta":  jax.random.normal(ks[9], (C,), jnp.float32) * 0.1,
        "bn_mean":  jnp.zeros((C,), jnp.float32),
        "bn_var":   jnp.ones((C,), jnp.float32),
        "bn_eps":   1e-5,
    }
    x = jax.random.normal(ks[10], (B, C, T, H, W), jnp.float32)

    fwd = jax.jit(non_local_block_forward,
                  static_argnames=("sub_sample", "return_nl_map", "matmul_dtype"))

    z_ref, nl_ref = reference_forward(x, params, sub_sample=True)

    # 1) return_nl_map=True path (materializes the (N, Np) map, Np-tiled).
    z_map, nl_map = fwd(x, params, sub_sample=True, return_nl_map=True)
    z_map = jax.block_until_ready(z_map)
    nl_map = jax.block_until_ready(nl_map)
    assert z_map.shape == (B, C, T, H, W)
    assert nl_map.shape == (B, N, Np)
    assert jnp.allclose(z_map, z_ref, rtol=1e-3, atol=1e-3), "z (map path) mismatch"
    assert jnp.allclose(nl_map, nl_ref, rtol=1e-4, atol=1e-4), "nl_map mismatch"

    # 2) Fast path (two fused kernels, reassociated matmuls, in-kernel pool).
    z_fast = jax.block_until_ready(fwd(x, params, sub_sample=True, return_nl_map=False))
    assert z_fast.shape == (B, C, T, H, W)
    assert jnp.allclose(z_fast, z_ref, rtol=5e-3, atol=5e-3), "z (fast path) mismatch"

    # 3) Fast path with bf16 MXU operands (f32 accumulation / epilogue).
    z_bf16 = jax.block_until_ready(
        fwd(x, params, sub_sample=True, return_nl_map=False, matmul_dtype=jnp.bfloat16))
    assert jnp.allclose(z_bf16, z_ref, rtol=5e-2, atol=5e-2), "z (bf16 path) mismatch"

    print("KERNEL_OK")
</pallas_src>

<mosaic_0001>
module attributes {stable_mosaic.version = 11 : i64} {
  func.func @_attn_map_kernel(%arg0: i32, %arg1: i32, %arg2: i32, %arg3: memref<1x8x128xf32, #tpu.memory_space<vmem>>, %arg4: memref<4x8xf32, #tpu.memory_space<vmem>>, %arg5: memref<4x1xf32, #tpu.memory_space<vmem>>, %arg6: memref<1x4x32xf32, #tpu.memory_space<vmem>>, %arg7: memref<1x4x32xf32, #tpu.memory_space<vmem>>, %arg8: memref<8x4xf32, #tpu.memory_space<vmem>>, %arg9: memref<8x1xf32, #tpu.memory_space<vmem>>, %arg10: memref<1x8x128xf32, #tpu.memory_space<vmem>>, %arg11: memref<1x128x32xf32, #tpu.memory_space<vmem>>, %arg12: memref<4x128xf32, #tpu.memory_space<vmem>>, %arg13: memref<4x128xf32, #tpu.memory_space<vmem>>) attributes {dimension_semantics = [#tpu.dimension_semantics<parallel>, #tpu.dimension_semantics<parallel>, #tpu.dimension_semantics<arbitrary>], iteration_bounds = array<i64: 2, 1, 1>, scalar_prefetch = 0 : i64, scratch_operands = 2 : i64, tpu.core_type = #tpu.core_type<tc>, window_params = [{transform_indices = @transform_0, window_bounds = array<i64: 1, 8, 128>}, {pipeline_mode = #tpu.pipeline_mode<synchronous>, transform_indices = @transform_1, window_bounds = array<i64: 4, 8>}, {pipeline_mode = #tpu.pipeline_mode<synchronous>, transform_indices = @transform_2, window_bounds = array<i64: 4, 1>}, {transform_indices = @transform_3, window_bounds = array<i64: 1, 4, 32>}, {transform_indices = @transform_4, window_bounds = array<i64: 1, 4, 32>}, {pipeline_mode = #tpu.pipeline_mode<synchronous>, transform_indices = @transform_5, window_bounds = array<i64: 8, 4>}, {pipeline_mode = #tpu.pipeline_mode<synchronous>, transform_indices = @transform_6, window_bounds = array<i64: 8, 1>}, {transform_indices = @transform_7, window_bounds = array<i64: 1, 8, 128>}, {transform_indices = @transform_8, window_bounds = array<i64: 1, 128, 32>}]} {
    %c0_i32 = arith.constant 0 : i32
    %0 = arith.cmpi eq, %arg2, %c0_i32 : i32
    %1 = arith.extui %0 : i1 to i32
    %c0_i32_0 = arith.constant 0 : i32
    %2 = arith.cmpi ne, %1, %c0_i32_0 : i32
    scf.if %2 {
      %c0_19 = arith.constant 0 : index
      %c0_20 = arith.constant 0 : index
      %c0_21 = arith.constant 0 : index
      %21 = vector.load %arg3[%c0_19, %c0_20, %c0_21] : memref<1x8x128xf32, #tpu.memory_space<vmem>>, vector<1x8x128xf32>
      %22 = vector.shape_cast %21 : vector<1x8x128xf32> to vector<8x128xf32>
      %c0_22 = arith.constant 0 : index
      %c0_23 = arith.constant 0 : index
      %23 = vector.load %arg4[%c0_22, %c0_23] : memref<4x8xf32, #tpu.memory_space<vmem>>, vector<4x8xf32>
      %cst_24 = arith.constant dense<0.000000e+00> : vector<4x128xf32>
      %24 = tpu.matmul %23, %22, %cst_24 {dimension_numbers = #tpu.dot_dimension_numbers<[1], [0], [0], [1], [0, 0, 1, 1], [], []>} : vector<4x8xf32>, vector<8x128xf32>, vector<4x128xf32> -> vector<4x128xf32>
      %c0_25 = arith.constant 0 : index
      %c0_26 = arith.constant 0 : index
      %25 = vector.load %arg5[%c0_25, %c0_26] : memref<4x1xf32, #tpu.memory_space<vmem>>, vector<4x1xf32>
      %26 = vector.broadcast %25 : vector<4x1xf32> to vector<4x128xf32>
      %27 = arith.addf %24, %26 : vector<4x128xf32>
      %c0_27 = arith.constant 0 : index
      %c0_28 = arith.constant 0 : index
      %28 = vector.load %arg12[%c0_27, %c0_28] : memref<4x128xf32, #tpu.memory_space<vmem>>, vector<4x128xf32>
      tpu.vector_store %arg12[%c0_27, %c0_28], %27 {strides = array<i32>} : memref<4x128xf32, #tpu.memory_space<vmem>>, vector<4x128xf32>,
      %cst_29 = arith.constant 0.000000e+00 : f32
      %29 = vector.broadcast %cst_29 : f32 to vector<4x128xf32>
      %c0_30 = arith.constant 0 : index
      %c0_31 = arith.constant 0 : index
      %30 = vector.load %arg13[%c0_30, %c0_31] : memref<4x128xf32, #tpu.memory_space<vmem>>, vector<4x128xf32>
      tpu.vector_store %arg13[%c0_30, %c0_31], %29 {strides = array<i32>} : memref<4x128xf32, #tpu.memory_space<vmem>>, vector<4x128xf32>,
    } else {
    }
    %c0 = arith.constant 0 : index
    %c0_1 = arith.constant 0 : index
    %3 = vector.load %arg12[%c0, %c0_1] : memref<4x128xf32, #tpu.memory_space<vmem>>, vector<4x128xf32>
    %c0_2 = arith.constant 0 : index
    %c0_3 = arith.constant 0 : index
    %c0_4 = arith.constant 0 : index
    %4 = vector.load %arg6[%c0_2, %c0_3, %c0_4] : memref<1x4x32xf32, #tpu.memory_space<vmem>>, vector<1x4x32xf32>
    %5 = vector.shape_cast %4 : vector<1x4x32xf32> to vector<4x32xf32>
    %cst = arith.constant dense<0.000000e+00> : vector<128x32xf32>
    %6 = tpu.matmul %3, %5, %cst {dimension_numbers = #tpu.dot_dimension_numbers<[0], [0], [1], [1], [0, 1, 1, 1], [], []>} : vector<4x128xf32>, vector<4x32xf32>, vector<128x32xf32> -> vector<128x32xf32>
    %cst_5 = arith.constant 3.125000e-02 : f32
    %7 = vector.broadcast %cst_5 : f32 to vector<128x32xf32>
    %8 = arith.mulf %6, %7 : vector<128x32xf32>
    %c0_6 = arith.constant 0 : index
    %c0_7 = arith.constant 0 : index
    %c0_8 = arith.constant 0 : index
    %9 = vector.load %arg11[%c0_6, %c0_7, %c0_8] : memref<1x128x32xf32, #tpu.memory_space<vmem>>, vector<1x128x32xf32>
    %10 = vector.shape_cast %9 : vector<1x128x32xf32> to vector<128x32xf32>
    %11 = vector.shape_cast %8 : vector<128x32xf32> to vector<1x128x32xf32>
    tpu.vector_store %arg11[%c0_6, %c0_7, %c0_8], %11 {strides = array<i32>} : memref<1x128x32xf32, #tpu.memory_space<vmem>>, vector<1x128x32xf32>,
    %c0_9 = arith.constant 0 : index
    %c0_10 = arith.constant 0 : index
    %12 = vector.load %arg13[%c0_9, %c0_10] : memref<4x128xf32, #tpu.memory_space<vmem>>, vector<4x128xf32>
    %c0_11 = arith.constant 0 : index
    %c0_12 = arith.constant 0 : index
    %c0_13 = arith.constant 0 : index
    %13 = vector.load %arg7[%c0_11, %c0_12, %c0_13] : memref<1x4x32xf32, #tpu.memory_space<vmem>>, vector<1x4x32xf32>
    %14 = vector.shape_cast %13 : vector<1x4x32xf32> to vector<4x32xf32>
    %cst_14 = arith.constant dense<0.000000e+00> : vector<4x128xf32>
    %15 = tpu.matmul %14, %8, %cst_14 {dimension_numbers = #tpu.dot_dimension_numbers<[1], [1], [0], [0], [0, 0, 1, 0], [], []>} : vector<4x32xf32>, vector<128x32xf32>, vector<4x128xf32> -> vector<4x128xf32>
    %16 = arith.addf %12, %15 : vector<4x128xf32>
    %c0_15 = arith.constant 0 : index
    %c0_16 = arith.constant 0 : index
    %17 = vector.load %arg13[%c0_15, %c0_16] : memref<4x128xf32, #tpu.memory_space<vmem>>, vector<4x128xf32>
    tpu.vector_store %arg13[%c0_15, %c0_16], %16 {strides = array<i32>} : memref<4x128xf32, #tpu.memory_space<vmem>>, vector<4x128xf32>,
    %c0_i32_17 = arith.constant 0 : i32
    %18 = arith.cmpi eq, %arg2, %c0_i32_17 : i32
    %19 = arith.extui %18 : i1 to i32
    %c0_i32_18 = arith.constant 0 : i32
    %20 = arith.cmpi ne, %19, %c0_i32_18 : i32
    scf.if %20 {
      %c0_19 = arith.constant 0 : index
      %c0_20 = arith.constant 0 : index
      %21 = vector.load %arg8[%c0_19, %c0_20] : memref<8x4xf32, #tpu.memory_space<vmem>>, vector<8x4xf32>
      %c0_21 = arith.constant 0 : index
      %c0_22 = arith.constant 0 : index
      %22 = vector.load %arg13[%c0_21, %c0_22] : memref<4x128xf32, #tpu.memory_space<vmem>>, vector<4x128xf32>
      %cst_23 = arith.constant dense<0.000000e+00> : vector<8x128xf32>
      %23 = tpu.matmul %21, %22, %cst_23 {dimension_numbers = #tpu.dot_dimension_numbers<[1], [0], [0], [1], [0, 0, 1, 1], [], []>} : vector<8x4xf32>, vector<4x128xf32>, vector<8x128xf32> -> vector<8x128xf32>
      %c0_24 = arith.constant 0 : index
      %c0_25 = arith.constant 0 : index
      %24 = vector.load %arg9[%c0_24, %c0_25] : memref<8x1xf32, #tpu.memory_space<vmem>>, vector<8x1xf32>
      %25 = vector.broadcast %24 : vector<8x1xf32> to vector<8x128xf32>
      %26 = arith.addf %23, %25 : vector<8x128xf32>
      %c0_26 = arith.constant 0 : index
      %c0_27 = arith.constant 0 : index
      %c0_28 = arith.constant 0 : index
      %27 = vector.load %arg3[%c0_26, %c0_27, %c0_28] : memref<1x8x128xf32, #tpu.memory_space<vmem>>, vector<1x8x128xf32>
      %28 = vector.shape_cast %27 : vector<1x8x128xf32> to vector<8x128xf32>
      %29 = arith.addf %26, %28 : vector<8x128xf32>
      %c0_29 = arith.constant 0 : index
      %c0_30 = arith.constant 0 : index
      %c0_31 = arith.constant 0 : index
      %30 = vector.load %arg10[%c0_29, %c0_30, %c0_31] : memref<1x8x128xf32, #tpu.memory_space<vmem>>, vector<1x8x128xf32>
      %31 = vector.shape_cast %30 : vector<1x8x128xf32> to vector<8x128xf32>
      %32 = vector.shape_cast %29 : vector<8x128xf32> to vector<1x8x128xf32>
      tpu.vector_store %arg10[%c0_29, %c0_30, %c0_31], %32 {strides = array<i32>} : memref<1x8x128xf32, #tpu.memory_space<vmem>>, vector<1x8x128xf32>,
    } else {
    }
    return
  }
  func.func @transform_0(%arg0: i32, %arg1: i32, %arg2: i32) -> (i32, i32, i32) {
    %c0_i32 = arith.constant 0 : i32
    %c0_i32_0 = arith.constant 0 : i32
    return %arg0, %c0_i32, %arg1 : i32, i32, i32
  }
  func.func @transform_1(%arg0: i32, %arg1: i32, %arg2: i32) -> (i32, i32) {
    %c0_i32 = arith.constant 0 : i32
    %c0_i32_0 = arith.constant 0 : i32
    %c0_i32_1 = arith.constant 0 : i32
    return %c0_i32, %c0_i32_0 : i32, i32
  }
  func.func @transform_2(%arg0: i32, %arg1: i32, %arg2: i32) -> (i32, i32) {
    %c0_i32 = arith.constant 0 : i32
    %c0_i32_0 = arith.constant 0 : i32
    %c0_i32_1 = arith.constant 0 : i32
    return %c0_i32, %c0_i32_0 : i32, i32
  }
  func.func @transform_3(%arg0: i32, %arg1: i32, %arg2: i32) -> (i32, i32, i32) {
    %c0_i32 = arith.constant 0 : i32
    %c0_i32_0 = arith.constant 0 : i32
    return %arg0, %c0_i32, %arg2 : i32, i32, i32
  }
  func.func @transform_4(%arg0: i32, %arg1: i32, %arg2: i32) -> (i32, i32, i32) {
    %c0_i32 = arith.constant 0 : i32
    %c0_i32_0 = arith.constant 0 : i32
    return %arg0, %c0_i32, %arg2 : i32, i32, i32
  }
  func.func @transform_5(%arg0: i32, %arg1: i32, %arg2: i32) -> (i32, i32) {
    %c0_i32 = arith.constant 0 : i32
    %c0_i32_0 = arith.constant 0 : i32
    %c0_i32_1 = arith.constant 0 : i32
    return %c0_i32, %c0_i32_0 : i32, i32
  }
  func.func @transform_6(%arg0: i32, %arg1: i32, %arg2: i32) -> (i32, i32) {
    %c0_i32 = arith.constant 0 : i32
    %c0_i32_0 = arith.constant 0 : i32
    %c0_i32_1 = arith.constant 0 : i32
    return %c0_i32, %c0_i32_0 : i32, i32
  }
  func.func @transform_7(%arg0: i32, %arg1: i32, %arg2: i32) -> (i32, i32, i32) {
    %c0_i32 = arith.constant 0 : i32
    %c0_i32_0 = arith.constant 0 : i32
    return %arg0, %c0_i32, %arg1 : i32, i32, i32
  }
  func.func @transform_8(%arg0: i32, %arg1: i32, %arg2: i32) -> (i32, i32, i32) {
    %c0_i32 = arith.constant 0 : i32
    return %arg0, %arg1, %arg2 : i32, i32, i32
  }
}

module attributes {stable_mosaic.version = 11 : i64} {
  func.func @_phi_g_kernel(%arg0: i32, %arg1: i32, %arg2: memref<1x8x128xf32, #tpu.memory_space<vmem>>, %arg3: memref<8x8xf32, #tpu.memory_space<vmem>>, %arg4: memref<8x1xf32, #tpu.memory_space<vmem>>, %arg5: memref<1x4x128xf32, #tpu.memory_space<vmem>>, %arg6: memref<1x4x128xf32, #tpu.memory_space<vmem>>) attributes {dimension_semantics = [#tpu.dimension_semantics<parallel>, #tpu.dimension_semantics<parallel>], iteration_bounds = array<i64: 2, 1>, scalar_prefetch = 0 : i64, scratch_operands = 0 : i64, tpu.core_type = #tpu.core_type<tc>, window_params = [{transform_indices = @transform_0, window_bounds = array<i64: 1, 8, 128>}, {pipeline_mode = #tpu.pipeline_mode<synchronous>, transform_indices = @transform_1, window_bounds = array<i64: 8, 8>}, {pipeline_mode = #tpu.pipeline_mode<synchronous>, transform_indices = @transform_2, window_bounds = array<i64: 8, 1>}, {transform_indices = @transform_3, window_bounds = array<i64: 1, 4, 128>}, {transform_indices = @transform_4, window_bounds = array<i64: 1, 4, 128>}]} {
    %c0 = arith.constant 0 : index
    %c0_0 = arith.constant 0 : index
    %c0_1 = arith.constant 0 : index
    %0 = vector.load %arg2[%c0, %c0_0, %c0_1] : memref<1x8x128xf32, #tpu.memory_space<vmem>>, vector<1x8x128xf32>
    %1 = vector.shape_cast %0 : vector<1x8x128xf32> to vector<8x128xf32>
    %c0_2 = arith.constant 0 : index
    %c0_3 = arith.constant 0 : index
    %2 = vector.load %arg3[%c0_2, %c0_3] : memref<8x8xf32, #tpu.memory_space<vmem>>, vector<8x8xf32>
    %cst = arith.constant dense<0.000000e+00> : vector<8x128xf32>
    %3 = tpu.matmul %2, %1, %cst {dimension_numbers = #tpu.dot_dimension_numbers<[1], [0], [0], [1], [0, 0, 1, 1], [], []>} : vector<8x8xf32>, vector<8x128xf32>, vector<8x128xf32> -> vector<8x128xf32>
    %c0_4 = arith.constant 0 : index
    %c0_5 = arith.constant 0 : index
    %4 = vector.load %arg4[%c0_4, %c0_5] : memref<8x1xf32, #tpu.memory_space<vmem>>, vector<8x1xf32>
    %5 = vector.broadcast %4 : vector<8x1xf32> to vector<8x128xf32>
    %6 = arith.addf %3, %5 : vector<8x128xf32>
    %7 = vector.extract_strided_slice %6 {offsets = [0, 0], sizes = [4, 128], strides = [1, 1]} : vector<8x128xf32> to vector<4x128xf32>
    %c0_6 = arith.constant 0 : index
    %c0_7 = arith.constant 0 : index
    %c0_8 = arith.constant 0 : index
    %8 = vector.load %arg5[%c0_6, %c0_7, %c0_8] : memref<1x4x128xf32, #tpu.memory_space<vmem>>, vector<1x4x128xf32>
    %9 = vector.shape_cast %8 : vector<1x4x128xf32> to vector<4x128xf32>
    %10 = vector.shape_cast %7 : vector<4x128xf32> to vector<1x4x128xf32>
    tpu.vector_store %arg5[%c0_6, %c0_7, %c0_8], %10 {strides = array<i32>} : memref<1x4x128xf32, #tpu.memory_space<vmem>>, vector<1x4x128xf32>,
    %11 = vector.extract_strided_slice %6 {offsets = [4, 0], sizes = [4, 128], strides = [1, 1]} : vector<8x128xf32> to vector<4x128xf32>
    %c0_9 = arith.constant 0 : index
    %c0_10 = arith.constant 0 : index
    %c0_11 = arith.constant 0 : index
    %12 = vector.load %arg6[%c0_9, %c0_10, %c0_11] : memref<1x4x128xf32, #tpu.memory_space<vmem>>, vector<1x4x128xf32>
    %13 = vector.shape_cast %12 : vector<1x4x128xf32> to vector<4x128xf32>
    %14 = vector.shape_cast %11 : vector<4x128xf32> to vector<1x4x128xf32>
    tpu.vector_store %arg6[%c0_9, %c0_10, %c0_11], %14 {strides = array<i32>} : memref<1x4x128xf32, #tpu.memory_space<vmem>>, vector<1x4x128xf32>,
    return
  }
  func.func @transform_0(%arg0: i32, %arg1: i32) -> (i32, i32, i32) {
    %c0_i32 = arith.constant 0 : i32
    %c0_i32_0 = arith.constant 0 : i32
    return %arg0, %c0_i32, %arg1 : i32, i32, i32
  }
  func.func @transform_1(%arg0: i32, %arg1: i32) -> (i32, i32) {
    %c0_i32 = arith.constant 0 : i32
    %c0_i32_0 = arith.constant 0 : i32
    %c0_i32_1 = arith.constant 0 : i32
    return %c0_i32, %c0_i32_0 : i32, i32
  }
  func.func @transform_2(%arg0: i32, %arg1: i32) -> (i32, i32) {
    %c0_i32 = arith.constant 0 : i32
    %c0_i32_0 = arith.constant 0 : i32
    %c0_i32_1 = arith.constant 0 : i32
    return %c0_i32, %c0_i32_0 : i32, i32
  }
  func.func @transform_3(%arg0: i32, %arg1: i32) -> (i32, i32, i32) {
    %c0_i32 = arith.constant 0 : i32
    %c0_i32_0 = arith.constant 0 : i32
    return %arg0, %c0_i32, %arg1 : i32, i32, i32
  }
  func.func @transform_4(%arg0: i32, %arg1: i32) -> (i32, i32, i32) {
    %c0_i32 = arith.constant 0 : i32
    %c0_i32_0 = arith.constant 0 : i32
    return %arg0, %c0_i32, %arg1 : i32, i32, i32
  }
}

</mosaic_0001>

<llo_original>
// kernel: non_local_block_forward.2
$region0: #{non_local_block_forward.2}
  #allocation0 [shape = 'u32[]', space=smem, size = 0x4, offset = 0x4, fixed_abs, tag = 'smem constant byte address 0x4 - core index']
  #allocation1 [shape = 'u32[72,128]{1,0:T(1,128)}', space=vmem, size = 0x9000, scoped, tag = 'internal scratch']
  %s0 = inlined_call_operand.vmem [shape: f32[2,8,128], index: 0, kind: input, shape index: {}]
  %s1 = inlined_call_operand.vmem [shape: f32[8,8], index: 1, kind: input, shape index: {}]
  %s2 = inlined_call_operand.vmem [shape: f32[8,1], index: 2, kind: input, shape index: {}]
  %s3 = inlined_call_operand.vmem [shape: f32[2,4,128], index: 3, kind: output, shape index: {0}]
  %s4 = inlined_call_operand.vmem [shape: f32[2,4,128], index: 4, kind: output, shape index: {1}]
  %5 = xla_tuple %s3, %s4
  %s6 = sld [smem:[#allocation0]]
  $region53: #{non_local_block_forward.2} parent=0
    _
  %s8 = ssub.s32 1, %s6
  %s9 = scalar_select 0, %s8, %s6
  loop: start=0, step=1, limit=4
  $region2: #{non_local_block_forward.2} parent=0 // loop_pre_header
    _
  $region3: #{non_local_block_forward.2} parent=0 // loop_header
    %s11 = sphi 0, %s15
    %p12 = scmp.ge.s32.totalorder %s11, 4
    %s18 = sphi 0, %s30
    %s19 = sphi 0, %s26
    %s20 = sphi 0, %s18
    %s21 = sphi 0, %s19
    %s22 = sphi 0, %s20
    %s23 = sphi 0, %s21
    %s35 = sphi 0, %s37
    %s38 = sphi 0, %s35
    %s39 = sphi 0, %s38
    %s55 = sphi 0, %s39
    %s59 = sphi 0, %s59
    %s61 = sphi 0, %s59
    %s62 = sphi 0, %s61
    %s76 = sphi 0, %s62
    %s80 = sphi 0, %s80
    %s82 = sphi 0, %s80
    %s83 = sphi 0, %s82
    %s97 = sphi 0, %s83
    %s105 = sphi 0, %s107
    %s108 = sphi 0, %s105
    %s109 = sphi 0, %s108
    %s125 = sphi 0, %s109
    %s133 = sphi 0, %s135
    %s136 = sphi 0, %s133
    %s137 = sphi 0, %s136
    %s153 = sphi 0, %s137
  $region4: #{non_local_block_forward.2} parent=0 // loop_header_branch
    %14 = sbr.rel (%p12) target = $region8
  $region5: #{non_local_block_forward.2} parent=0 // loop_body
    %s16 = ssub.s32 %s11, 1
    %s17 = ssub.s32 %s11, 2
    %s24 = sadd.s32 1, %s19
    %p25 = scmp.ge.s32.totalorder %s24, 1
    %s26 = scalar_select %p25, 0, %s24
    %s27 = sadd.s32 1, %s18
    %s28 = scalar_select %p25, %s27, %s18
    %p29 = scmp.ge.s32.totalorder %s28, 2
    %s30 = scalar_select %p29, 0, %s28
    %s31 = ssub.s32 %s18, %s30
    %s32 = ssub.s32 %s19, %s26
    %s33 = sor.u32 %s31, %s32
    %p34 = scmp.eq.s32.totalorder %s33, 0
    %s36 = sadd.s32 %s35, 1
    %s37 = scalar_select %p34, %s35, %s36
    %p40 = pneg %p34
    %p41 = scmp.eq.s32.totalorder %s11, 1
    %p42 = por %p40, %p41
    %p43 = scmp.ne.s32.totalorder %s35, %s38
    %p44 = scmp.eq.s32.totalorder %s11, 0
    %p45 = por %p43, %p44
    %p46 = scmp.ne.s32.totalorder %s35, %s38
    %p47 = scmp.eq.s32.totalorder %s16, 1
    %p48 = por %p46, %p47
    %p49 = scmp.ne.s32.totalorder %s38, %s39
    %p50 = scmp.eq.s32.totalorder %s16, 0
    %p51 = por %p49, %p50
    %p52 = scmp.ne.s32.totalorder %s38, %s39
    %p53 = scmp.eq.s32.totalorder %s17, 1
    %p54 = por %p52, %p53
    %p56 = scmp.ne.s32.totalorder %s39, %s55
    %p57 = scmp.eq.s32.totalorder %s17, 0
    %p58 = por %p56, %p57
    %s60 = sadd.s32 %s59, 1
    %p63 = scmp.eq.s32.totalorder %s11, 1
    %p64 = scmp.ne.s32.totalorder %s59, %s61
    %p65 = scmp.eq.s32.totalorder %s11, 0
    %p66 = por %p64, %p65
    %p67 = scmp.ne.s32.totalorder %s59, %s61
    %p68 = scmp.eq.s32.totalorder %s16, 1
    %p69 = por %p67, %p68
    %p70 = scmp.ne.s32.totalorder %s61, %s62
    %p71 = scmp.eq.s32.totalorder %s16, 0
    %p72 = por %p70, %p71
    %p73 = scmp.ne.s32.totalorder %s61, %s62
    %p74 = scmp.eq.s32.totalorder %s17, 1
    %p75 = por %p73, %p74
    %p77 = scmp.ne.s32.totalorder %s62, %s76
    %p78 = scmp.eq.s32.totalorder %s17, 0
    %p79 = por %p77, %p78
    %s81 = sadd.s32 %s80, 1
    %p84 = scmp.eq.s32.totalorder %s11, 1
    %p85 = scmp.ne.s32.totalorder %s80, %s82
    %p86 = scmp.eq.s32.totalorder %s11, 0
    %p87 = por %p85, %p86
    %p88 = scmp.ne.s32.totalorder %s80, %s82
    %p89 = scmp.eq.s32.totalorder %s16, 1
    %p90 = por %p88, %p89
    %p91 = scmp.ne.s32.totalorder %s82, %s83
    %p92 = scmp.eq.s32.totalorder %s16, 0
    %p93 = por %p91, %p92
    %p94 = scmp.ne.s32.totalorder %s82, %s83
    %p95 = scmp.eq.s32.totalorder %s17, 1
    %p96 = por %p94, %p95
    %p98 = scmp.ne.s32.totalorder %s83, %s97
    %p99 = scmp.eq.s32.totalorder %s17, 0
    %p100 = por %p98, %p99
    %s101 = ssub.s32 %s18, %s30
    %s102 = ssub.s32 %s19, %s26
    %s103 = sor.u32 %s101, %s102
    %p104 = scmp.eq.s32.totalorder %s103, 0
    %s106 = sadd.s32 %s105, 1
    %s107 = scalar_select %p104, %s105, %s106
    %p110 = pneg %p104
    %p111 = scmp.eq.s32.totalorder %s11, 1
    %p112 = por %p110, %p111
    %p113 = scmp.ne.s32.totalorder %s105, %s108
    %p114 = scmp.eq.s32.totalorder %s11, 0
    %p115 = por %p113, %p114
    %p116 = scmp.ne.s32.totalorder %s105, %s108
    %p117 = scmp.eq.s32.totalorder %s16, 1
    %p118 = por %p116, %p117
    %p119 = scmp.ne.s32.totalorder %s108, %s109
    %p120 = scmp.eq.s32.totalorder %s16, 0
    %p121 = por %p119, %p120
    %p122 = scmp.ne.s32.totalorder %s108, %s109
    %p123 = scmp.eq.s32.totalorder %s17, 1
    %p124 = por %p122, %p123
    %p126 = scmp.ne.s32.totalorder %s109, %s125
    %p127 = scmp.eq.s32.totalorder %s17, 0
    %p128 = por %p126, %p127
    %s129 = ssub.s32 %s18, %s30
    %s130 = ssub.s32 %s19, %s26
    %s131 = sor.u32 %s129, %s130
    %p132 = scmp.eq.s32.totalorder %s131, 0
    %s134 = sadd.s32 %s133, 1
    %s135 = scalar_select %p132, %s133, %s134
    %p138 = pneg %p132
    %p139 = scmp.eq.s32.totalorder %s11, 1
    %p140 = por %p138, %p139
    %p141 = scmp.ne.s32.totalorder %s133, %s136
    %p142 = scmp.eq.s32.totalorder %s11, 0
    %p143 = por %p141, %p142
    %p144 = scmp.ne.s32.totalorder %s133, %s136
    %p145 = scmp.eq.s32.totalorder %s16, 1
    %p146 = por %p144, %p145
    %p147 = scmp.ne.s32.totalorder %s136, %s137
    %p148 = scmp.eq.s32.totalorder %s16, 0
    %p149 = por %p147, %p148
    %p150 = scmp.ne.s32.totalorder %s136, %s137
    %p151 = scmp.eq.s32.totalorder %s17, 1
    %p152 = por %p150, %p151
    %p154 = scmp.ne.s32.totalorder %s137, %s153
    %p155 = scmp.eq.s32.totalorder %s17, 0
    %p156 = por %p154, %p155
    %p157 = scmp.le.s32.totalorder 1, %s11
    %p158 = scmp.lt.s32.totalorder %s11, 3
    %p159 = pnand %p157, %p158
    %p160 = pneg %p159
    // Predicated region
    $region9: #{non_local_block_forward.2} parent=5 // pred_check
      _
    $region10: #{non_local_block_forward.2} parent=5 // pred_check_branch
      %162 = sbr.rel (%p159) target = $region12
    $region11: #{non_local_block_forward.2} parent=5 // pred_region
      %s163 = ssub.s32 %s11, 1
      // Predicated region
      $region13: #{non_local_block_forward.2} parent=11 // pred_check
        %p164 = pneg %p72
      $region14: #{non_local_block_forward.2} parent=11 // pred_check_branch
        %166 = sbr.rel (%p164) target = $region16
      $region15: #{non_local_block_forward.2} parent=11 // pred_region
        _
      $region16: #{non_local_block_forward.2} parent=11 // pred_fallthru
        _
      // Predicated region
      $region17: #{non_local_block_forward.2} parent=11 // pred_check
        %p167 = pneg %p93
      $region18: #{non_local_block_forward.2} parent=11 // pred_check_branch
        %169 = sbr.rel (%p167) target = $region20
      $region19: #{non_local_block_forward.2} parent=11 // pred_region
        _
      $region20: #{non_local_block_forward.2} parent=11 // pred_fallthru
        _
    $region12: #{non_local_block_forward.2} parent=5 // pred_fallthru
      _
    %p170 = scmp.lt.s32.totalorder %s11, 2
    // Predicated region
    $region21: #{non_local_block_forward.2} parent=5 // pred_check
      %p171 = pneg %p170
    $region22: #{non_local_block_forward.2} parent=5 // pred_check_branch
      %173 = sbr.rel (%p171) target = $region24
    $region23: #{non_local_block_forward.2} parent=5 // pred_region
      // Predicated region
      $region25: #{non_local_block_forward.2} parent=23 // pred_check
        %p174 = pneg %p45
      $region26: #{non_local_block_forward.2} parent=23 // pred_check_branch
        %176 = sbr.rel (%p174) target = $region28
      $region27: #{non_local_block_forward.2} parent=23 // pred_region
        %p177 = scmp.lt.s32.totalorder %s18, 1
        %s178 = scalar_select %p177, %s18, 1
        %p179 = scmp.lt.s32.totalorder %s19, 0
        %s180 = scalar_select %p179, %s19, 0
        %s181 = sadd.s32 %s180, %s178
        %s182 = smul.addr %s181, 8
        %s183 = scalar_lea.vmem %s0, %s182
      $region28: #{non_local_block_forward.2} parent=23 // pred_fallthru
        _
    $region24: #{non_local_block_forward.2} parent=5 // pred_fallthru
      _
    %p184 = scmp.le.s32.totalorder 1, %s11
    %p185 = scmp.lt.s32.totalorder %s11, 3
    %p186 = pnand %p184, %p185
    %p187 = pneg %p186
    // Predicated region
    $region29: #{non_local_block_forward.2} parent=5 // pred_check
      _
    $region30: #{non_local_block_forward.2} parent=5 // pred_check_branch
      %189 = sbr.rel (%p186) target = $region32
    $region31: #{non_local_block_forward.2} parent=5 // pred_region
      %s190 = ssub.s32 %s11, 1
      %p191 = scmp.lt.s32.totalorder %s20, 1
      %s192 = scalar_select %p191, %s20, 1
      %p193 = scmp.lt.s32.totalorder %s21, 0
      %s194 = scalar_select %p193, %s21, 0
      %s195 = sadd.s32 %s194, %s192
      %s196 = smul.addr %s195, 8
      %s197 = scalar_lea.vmem %s0, %s196
      %p198 = pneg %p51
      %p199 = pneg %p48
      %p200 = pneg %p72
      %p201 = pneg %p69
      %p202 = pneg %p93
      %p203 = pneg %p90
      %p204 = pneg %p121
      %p205 = pneg %p118
      %p206 = scmp.lt.s32.totalorder %s20, 1
      %s207 = scalar_select %p206, %s20, 1
      %p208 = scmp.lt.s32.totalorder %s21, 0
      %s209 = scalar_select %p208, %s21, 0
      %s210 = sadd.s32 %s209, %s207
      %s211 = smul.addr %s210, 4
      %s212 = scalar_lea.vmem %s3, %s211
      %p213 = pneg %p149
      %p214 = pneg %p146
      %p215 = scmp.lt.s32.totalorder %s20, 1
      %s216 = scalar_select %p215, %s20, 1
      %p217 = scmp.lt.s32.totalorder %s21, 0
      %s218 = scalar_select %p217, %s21, 0
      %s219 = sadd.s32 %s218, %s216
      %s220 = smul.addr %s219, 4
      %s221 = scalar_lea.vmem %s4, %s220
      %p222 = scmp.lt.s32.totalorder %s20, 1
      %s223 = scalar_select %p222, %s20, 1
      %p224 = scmp.lt.s32.totalorder %s21, 0
      %s225 = scalar_select %p224, %s21, 0
      %s226 = sadd.s32 %s225, %s223
      %s227 = smul.addr %s226, 8
      %s228 = scalar_lea.vmem %s0, %s227
      %p229 = scmp.lt.s32.totalorder %s20, 1
      %s230 = scalar_select %p229, %s20, 1
      %p231 = scmp.lt.s32.totalorder %s21, 0
      %s232 = scalar_select %p231, %s21, 0
      %s233 = sadd.s32 %s232, %s230
      %s234 = smul.addr %s233, 4
      %s235 = scalar_lea.vmem %s3, %s234
      %p236 = scmp.lt.s32.totalorder %s20, 1
      %s237 = scalar_select %p236, %s20, 1
      %p238 = scmp.lt.s32.totalorder %s21, 0
      %s239 = scalar_select %p238, %s21, 0
      %s240 = sadd.s32 %s239, %s237
      %s241 = smul.addr %s240, 4
      %s242 = scalar_lea.vmem %s4, %s241
      %v243 = vld [vmem:[%s228] sm:$0xff]
      %v244 = vld [vmem:[%s1] sm:$0xff]
      %v245 = vld [vmem:[%s2] sm:$0xff]
      %247 = vset.pattern.permute.xlu0 0
      %248 = vperm.xlu0 %247, %v245
      %v249 = vpop.permute.xlu0 %248
      %vm251 = vcmask 64512
      %v253 = vsel %vm251, %v244, 0
      %255 = vmatpush.msra.mxu0 0.0
      %256 = vmatpush.msra.mxu0 0.0
      %257 = vmatpush.msra.mxu0 0.0
      %258 = vmatpush.msra.mxu0 0.0
      %259 = vmatpush.msra.mxu0 0.0
      %260 = vmatpush.msra.mxu0 0.0
      %261 = vmatpush.msra.mxu0 0.0
      %262 = vmatpush.msra.mxu0 0.0
      %263 = vmatpush.msra.mxu0 0.0
      %264 = vmatpush.msra.mxu0 0.0
      %265 = vmatpush.msra.mxu0 0.0
      %266 = vmatpush.msra.mxu0 0.0
      %267 = vmatpush.msra.mxu0 0.0
      %268 = vmatpush.msra.mxu0 0.0
      %269 = vmatpush.msra.mxu0 0.0
      %270 = vmatpush.msra.mxu0 %v243
      %271 = vmatmul.f32.gmra.mxu0 %v253
      %v272 = vpop.f32.mrf.mxu0
      %v273 = vadd.f32 %v249, %v272
      %274 = vdwg.mxu0
      %275 = vst [vmem:[%s235] sm:$0xf] %v273
      %276 = vst [vmem:[%s242 - $0x4] sm:$0xf0] %v273
      %p277 = scmp.lt.s32.totalorder %s20, 1
      %s278 = scalar_select %p277, %s20, 1
      %p279 = scmp.lt.s32.totalorder %s21, 0
      %s280 = scalar_select %p279, %s21, 0
      %s281 = sadd.s32 %s280, %s278
      %s282 = smul.addr %s281, 4
      %s283 = scalar_lea.vmem %s3, %s282
      %p284 = scmp.lt.s32.totalorder %s20, 1
      %s285 = scalar_select %p284, %s20, 1
      %p286 = scmp.lt.s32.totalorder %s21, 0
      %s287 = scalar_select %p286, %s21, 0
      %s288 = sadd.s32 %s287, %s285
      %s289 = smul.addr %s288, 4
      %s290 = scalar_lea.vmem %s4, %s289
      // Predicated region
      $region33: #{non_local_block_forward.2} parent=31 // pred_check
        %p291 = pneg %p118
      $region34: #{non_local_block_forward.2} parent=31 // pred_check_branch
        %293 = sbr.rel (%p291) target = $region36
      $region35: #{non_local_block_forward.2} parent=31 // pred_region
        _
      $region36: #{non_local_block_forward.2} parent=31 // pred_fallthru
        _
      // Predicated region
      $region37: #{non_local_block_forward.2} parent=31 // pred_check
        %p294 = pneg %p146
      $region38: #{non_local_block_forward.2} parent=31 // pred_check_branch
        %296 = sbr.rel (%p294) target = $region40
      $region39: #{non_local_block_forward.2} parent=31 // pred_region
        _
      $region40: #{non_local_block_forward.2} parent=31 // pred_fallthru
        _
    $region32: #{non_local_block_forward.2} parent=5 // pred_fallthru
      _
    %p297 = scmp.le.s32.totalorder 2, %s11
    // Predicated region
    $region41: #{non_local_block_forward.2} parent=5 // pred_check
      %p298 = pneg %p297
    $region42: #{non_local_block_forward.2} parent=5 // pred_check_branch
      %300 = sbr.rel (%p298) target = $region44
    $region43: #{non_local_block_forward.2} parent=5 // pred_region
      %s301 = ssub.s32 %s11, 2
      // Predicated region
      $region45: #{non_local_block_forward.2} parent=43 // pred_check
        %p302 = pneg %p124
      $region46: #{non_local_block_forward.2} parent=43 // pred_check_branch
        %304 = sbr.rel (%p302) target = $region48
      $region47: #{non_local_block_forward.2} parent=43 // pred_region
        %p305 = scmp.lt.s32.totalorder %s22, 1
        %s306 = scalar_select %p305, %s22, 1
        %p307 = scmp.lt.s32.totalorder %s23, 0
        %s308 = scalar_select %p307, %s23, 0
        %s309 = sadd.s32 %s308, %s306
        %s310 = smul.addr %s309, 4
        %s311 = scalar_lea.vmem %s3, %s310
      $region48: #{non_local_block_forward.2} parent=43 // pred_fallthru
        _
      // Predicated region
      $region49: #{non_local_block_forward.2} parent=43 // pred_check
        %p312 = pneg %p152
      $region50: #{non_local_block_forward.2} parent=43 // pred_check_branch
        %314 = sbr.rel (%p312) target = $region52
      $region51: #{non_local_block_forward.2} parent=43 // pred_region
        %p315 = scmp.lt.s32.totalorder %s22, 1
        %s316 = scalar_select %p315, %s22, 1
        %p317 = scmp.lt.s32.totalorder %s23, 0
        %s318 = scalar_select %p317, %s23, 0
        %s319 = sadd.s32 %s318, %s316
        %s320 = smul.addr %s319, 4
        %s321 = scalar_lea.vmem %s4, %s320
      $region52: #{non_local_block_forward.2} parent=43 // pred_fallthru
        _
    $region44: #{non_local_block_forward.2} parent=5 // pred_fallthru
      _
  $region6: #{non_local_block_forward.2} parent=0 // loop_footer
    %s15 = sadd.s32 1, %s11
  $region7: #{non_local_block_forward.2} parent=0 // loop_footer_branch
    %10 = sbr.rel target = $region3
  $region8: #{non_local_block_forward.2} parent=0 // loop_exit
    _

// kernel: non_local_block_forward.3
$region0: #{non_local_block_forward.3}
  #allocation0 [shape = 'u32[]', space=smem, size = 0x4, offset = 0x4, fixed_abs, tag = 'smem constant byte address 0x4 - core index']
  #allocation1 [shape = 'u32[72,128]{1,0:T(1,128)}', space=vmem, size = 0x9000, scoped, tag = 'internal scratch']
  #allocation2 [shape = 'f32[4,128]{1,0:T(4,128)}', space=vmem, size = 0x800, scoped, tag = 'scratch operand']
  #allocation3 [shape = 'f32[4,128]{1,0:T(4,128)}', space=vmem, size = 0x800, scoped, tag = 'scratch operand']
  %s0 = inlined_call_operand.vmem [shape: f32[2,8,128], index: 0, kind: input, shape index: {}]
  %s1 = inlined_call_operand.vmem [shape: f32[4,8], index: 1, kind: input, shape index: {}]
  %s2 = inlined_call_operand.vmem [shape: f32[4,1], index: 2, kind: input, shape index: {}]
  %s3 = inlined_call_operand.vmem [shape: f32[2,4,32], index: 3, kind: input, shape index: {}]
  %s4 = inlined_call_operand.vmem [shape: f32[2,4,32], index: 4, kind: input, shape index: {}]
  %s5 = inlined_call_operand.vmem [shape: f32[8,4], index: 5, kind: input, shape index: {}]
  %s6 = inlined_call_operand.vmem [shape: f32[8,1], index: 6, kind: input, shape index: {}]
  %s7 = inlined_call_operand.vmem [shape: f32[2,8,128], index: 7, kind: output, shape index: {0}]
  %s8 = inlined_call_operand.vmem [shape: f32[2,128,32], index: 8, kind: output, shape index: {1}]
  %9 = xla_tuple %s7, %s8
  %s10 = sld [smem:[#allocation0]]
  $region77: #{non_local_block_forward.3} parent=0
    _
  %s12 = ssub.s32 1, %s10
  %s13 = scalar_select 0, %s12, %s10
  loop: start=0, step=1, limit=4
  $region2: #{non_local_block_forward.3} parent=0 // loop_pre_header
    _
  $region3: #{non_local_block_forward.3} parent=0 // loop_header
    %s15 = sphi 0, %s19
    %p16 = scmp.ge.s32.totalorder %s15, 4
    %s22 = sphi 0, %s41
    %s23 = sphi 0, %s37
    %s24 = sphi 0, %s33
    %s25 = sphi 0, %s22
    %s26 = sphi 0, %s23
    %s27 = sphi 0, %s24
    %s28 = sphi 0, %s25
    %s29 = sphi 0, %s26
    %s30 = sphi 0, %s27
    %s46 = sphi 0, %s48
    %s49 = sphi 0, %s46
    %s50 = sphi 0, %s49
    %s66 = sphi 0, %s50
    %s70 = sphi 0, %s70
    %s72 = sphi 0, %s70
    %s73 = sphi 0, %s72
    %s87 = sphi 0, %s73
    %s91 = sphi 0, %s91
    %s93 = sphi 0, %s91
    %s94 = sphi 0, %s93
    %s108 = sphi 0, %s94
    %s116 = sphi 0, %s118
    %s119 = sphi 0, %s116
    %s120 = sphi 0, %s119
    %s136 = sphi 0, %s120
    %s144 = sphi 0, %s146
    %s147 = sphi 0, %s144
    %s148 = sphi 0, %s147
    %s164 = sphi 0, %s148
    %s168 = sphi 0, %s168
    %s170 = sphi 0, %s168
    %s171 = sphi 0, %s170
    %s185 = sphi 0, %s171
    %s189 = sphi 0, %s189
    %s191 = sphi 0, %s189
    %s192 = sphi 0, %s191
    %s206 = sphi 0, %s192
    %s214 = sphi 0, %s216
    %s217 = sphi 0, %s214
    %s218 = sphi 0, %s217
    %s234 = sphi 0, %s218
    %s244 = sphi 0, %s246
    %s247 = sphi 0, %s244
    %s248 = sphi 0, %s247
    %s264 = sphi 0, %s248
  $region4: #{non_local_block_forward.3} parent=0 // loop_header_branch
    %18 = sbr.rel (%p16) target = $region8
  $region5: #{non_local_block_forward.3} parent=0 // loop_body
    %s20 = ssub.s32 %s15, 1
    %s21 = ssub.s32 %s15, 2
    %s31 = sadd.s32 1, %s24
    %p32 = scmp.ge.s32.totalorder %s31, 1
    %s33 = scalar_select %p32, 0, %s31
    %s34 = sadd.s32 1, %s23
    %s35 = scalar_select %p32, %s34, %s23
    %p36 = scmp.ge.s32.totalorder %s35, 1
    %s37 = scalar_select %p36, 0, %s35
    %s38 = sadd.s32 1, %s22
    %s39 = scalar_select %p36, %s38, %s22
    %p40 = scmp.ge.s32.totalorder %s39, 2
    %s41 = scalar_select %p40, 0, %s39
    %s42 = ssub.s32 %s22, %s41
    %s43 = ssub.s32 %s23, %s37
    %s44 = sor.u32 %s42, %s43
    %p45 = scmp.eq.s32.totalorder %s44, 0
    %s47 = sadd.s32 %s46, 1
    %s48 = scalar_select %p45, %s46, %s47
    %p51 = pneg %p45
    %p52 = scmp.eq.s32.totalorder %s15, 1
    %p53 = por %p51, %p52
    %p54 = scmp.ne.s32.totalorder %s46, %s49
    %p55 = scmp.eq.s32.totalorder %s15, 0
    %p56 = por %p54, %p55
    %p57 = scmp.ne.s32.totalorder %s46, %s49
    %p58 = scmp.eq.s32.totalorder %s20, 1
    %p59 = por %p57, %p58
    %p60 = scmp.ne.s32.totalorder %s49, %s50
    %p61 = scmp.eq.s32.totalorder %s20, 0
    %p62 = por %p60, %p61
    %p63 = scmp.ne.s32.totalorder %s49, %s50
    %p64 = scmp.eq.s32.totalorder %s21, 1
    %p65 = por %p63, %p64
    %p67 = scmp.ne.s32.totalorder %s50, %s66
    %p68 = scmp.eq.s32.totalorder %s21, 0
    %p69 = por %p67, %p68
    %s71 = sadd.s32 %s70, 1
    %p74 = scmp.eq.s32.totalorder %s15, 1
    %p75 = scmp.ne.s32.totalorder %s70, %s72
    %p76 = scmp.eq.s32.totalorder %s15, 0
    %p77 = por %p75, %p76
    %p78 = scmp.ne.s32.totalorder %s70, %s72
    %p79 = scmp.eq.s32.totalorder %s20, 1
    %p80 = por %p78, %p79
    %p81 = scmp.ne.s32.totalorder %s72, %s73
    %p82 = scmp.eq.s32.totalorder %s20, 0
    %p83 = por %p81, %p82
    %p84 = scmp.ne.s32.totalorder %s72, %s73
    %p85 = scmp.eq.s32.totalorder %s21, 1
    %p86 = por %p84, %p85
    %p88 = scmp.ne.s32.totalorder %s73, %s87
    %p89 = scmp.eq.s32.totalorder %s21, 0
    %p90 = por %p88, %p89
    %s92 = sadd.s32 %s91, 1
    %p95 = scmp.eq.s32.totalorder %s15, 1
    %p96 = scmp.ne.s32.totalorder %s91, %s93
    %p97 = scmp.eq.s32.totalorder %s15, 0
    %p98 = por %p96, %p97
    %p99 = scmp.ne.s32.totalorder %s91, %s93
    %p100 = scmp.eq.s32.totalorder %s20, 1
    %p101 = por %p99, %p100
    %p102 = scmp.ne.s32.totalorder %s93, %s94
    %p103 = scmp.eq.s32.totalorder %s20, 0
    %p104 = por %p102, %p103
    %p105 = scmp.ne.s32.totalorder %s93, %s94
    %p106 = scmp.eq.s32.totalorder %s21, 1
    %p107 = por %p105, %p106
    %p109 = scmp.ne.s32.totalorder %s94, %s108
    %p110 = scmp.eq.s32.totalorder %s21, 0
    %p111 = por %p109, %p110
    %s112 = ssub.s32 %s22, %s41
    %s113 = ssub.s32 %s24, %s33
    %s114 = sor.u32 %s112, %s113
    %p115 = scmp.eq.s32.totalorder %s114, 0
    %s117 = sadd.s32 %s116, 1
    %s118 = scalar_select %p115, %s116, %s117
    %p121 = pneg %p115
    %p122 = scmp.eq.s32.totalorder %s15, 1
    %p123 = por %p121, %p122
    %p124 = scmp.ne.s32.totalorder %s116, %s119
    %p125 = scmp.eq.s32.totalorder %s15, 0
    %p126 = por %p124, %p125
    %p127 = scmp.ne.s32.totalorder %s116, %s119
    %p128 = scmp.eq.s32.totalorder %s20, 1
    %p129 = por %p127, %p128
    %p130 = scmp.ne.s32.totalorder %s119, %s120
    %p131 = scmp.eq.s32.totalorder %s20, 0
    %p132 = por %p130, %p131
    %p133 = scmp.ne.s32.totalorder %s119, %s120
    %p134 = scmp.eq.s32.totalorder %s21, 1
    %p135 = por %p133, %p134
    %p137 = scmp.ne.s32.totalorder %s120, %s136
    %p138 = scmp.eq.s32.totalorder %s21, 0
    %p139 = por %p137, %p138
    %s140 = ssub.s32 %s22, %s41
    %s141 = ssub.s32 %s24, %s33
    %s142 = sor.u32 %s140, %s141
    %p143 = scmp.eq.s32.totalorder %s142, 0
    %s145 = sadd.s32 %s144, 1
    %s146 = scalar_select %p143, %s144, %s145
    %p149 = pneg %p143
    %p150 = scmp.eq.s32.totalorder %s15, 1
    %p151 = por %p149, %p150
    %p152 = scmp.ne.s32.totalorder %s144, %s147
    %p153 = scmp.eq.s32.totalorder %s15, 0
    %p154 = por %p152, %p153
    %p155 = scmp.ne.s32.totalorder %s144, %s147
    %p156 = scmp.eq.s32.totalorder %s20, 1
    %p157 = por %p155, %p156
    %p158 = scmp.ne.s32.totalorder %s147, %s148
    %p159 = scmp.eq.s32.totalorder %s20, 0
    %p160 = por %p158, %p159
    %p161 = scmp.ne.s32.totalorder %s147, %s148
    %p162 = scmp.eq.s32.totalorder %s21, 1
    %p163 = por %p161, %p162
    %p165 = scmp.ne.s32.totalorder %s148, %s164
    %p166 = scmp.eq.s32.totalorder %s21, 0
    %p167 = por %p165, %p166
    %s169 = sadd.s32 %s168, 1
    %p172 = scmp.eq.s32.totalorder %s15, 1
    %p173 = scmp.ne.s32.totalorder %s168, %s170
    %p174 = scmp.eq.s32.totalorder %s15, 0
    %p175 = por %p173, %p174
    %p176 = scmp.ne.s32.totalorder %s168, %s170
    %p177 = scmp.eq.s32.totalorder %s20, 1
    %p178 = por %p176, %p177
    %p179 = scmp.ne.s32.totalorder %s170, %s171
    %p180 = scmp.eq.s32.totalorder %s20, 0
    %p181 = por %p179, %p180
    %p182 = scmp.ne.s32.totalorder %s170, %s171
    %p183 = scmp.eq.s32.totalorder %s21, 1
    %p184 = por %p182, %p183
    %p186 = scmp.ne.s32.totalorder %s171, %s185
    %p187 = scmp.eq.s32.totalorder %s21, 0
    %p188 = por %p186, %p187
    %s190 = sadd.s32 %s189, 1
    %p193 = scmp.eq.s32.totalorder %s15, 1
    %p194 = scmp.ne.s32.totalorder %s189, %s191
    %p195 = scmp.eq.s32.totalorder %s15, 0
    %p196 = por %p194, %p195
    %p197 = scmp.ne.s32.totalorder %s189, %s191
    %p198 = scmp.eq.s32.totalorder %s20, 1
    %p199 = por %p197, %p198
    %p200 = scmp.ne.s32.totalorder %s191, %s192
    %p201 = scmp.eq.s32.totalorder %s20, 0
    %p202 = por %p200, %p201
    %p203 = scmp.ne.s32.totalorder %s191, %s192
    %p204 = scmp.eq.s32.totalorder %s21, 1
    %p205 = por %p203, %p204
    %p207 = scmp.ne.s32.totalorder %s192, %s206
    %p208 = scmp.eq.s32.totalorder %s21, 0
    %p209 = por %p207, %p208
    %s210 = ssub.s32 %s22, %s41
    %s211 = ssub.s32 %s23, %s37
    %s212 = sor.u32 %s210, %s211
    %p213 = scmp.eq.s32.totalorder %s212, 0
    %s215 = sadd.s32 %s214, 1
    %s216 = scalar_select %p213, %s214, %s215
    %p219 = pneg %p213
    %p220 = scmp.eq.s32.totalorder %s15, 1
    %p221 = por %p219, %p220
    %p222 = scmp.ne.s32.totalorder %s214, %s217
    %p223 = scmp.eq.s32.totalorder %s15, 0
    %p224 = por %p222, %p223
    %p225 = scmp.ne.s32.totalorder %s214, %s217
    %p226 = scmp.eq.s32.totalorder %s20, 1
    %p227 = por %p225, %p226
    %p228 = scmp.ne.s32.totalorder %s217, %s218
    %p229 = scmp.eq.s32.totalorder %s20, 0
    %p230 = por %p228, %p229
    %p231 = scmp.ne.s32.totalorder %s217, %s218
    %p232 = scmp.eq.s32.totalorder %s21, 1
    %p233 = por %p231, %p232
    %p235 = scmp.ne.s32.totalorder %s218, %s234
    %p236 = scmp.eq.s32.totalorder %s21, 0
    %p237 = por %p235, %p236
    %s238 = ssub.s32 %s22, %s41
    %s239 = ssub.s32 %s23, %s37
    %s240 = sor.u32 %s238, %s239
    %s241 = ssub.s32 %s24, %s33
    %s242 = sor.u32 %s240, %s241
    %p243 = scmp.eq.s32.totalorder %s242, 0
    %s245 = sadd.s32 %s244, 1
    %s246 = scalar_select %p243, %s244, %s245
    %p249 = pneg %p243
    %p250 = scmp.eq.s32.totalorder %s15, 1
    %p251 = por %p249, %p250
    %p252 = scmp.ne.s32.totalorder %s244, %s247
    %p253 = scmp.eq.s32.totalorder %s15, 0
    %p254 = por %p252, %p253
    %p255 = scmp.ne.s32.totalorder %s244, %s247
    %p256 = scmp.eq.s32.totalorder %s20, 1
    %p257 = por %p255, %p256
    %p258 = scmp.ne.s32.totalorder %s247, %s248
    %p259 = scmp.eq.s32.totalorder %s20, 0
    %p260 = por %p258, %p259
    %p261 = scmp.ne.s32.totalorder %s247, %s248
    %p262 = scmp.eq.s32.totalorder %s21, 1
    %p263 = por %p261, %p262
    %p265 = scmp.ne.s32.totalorder %s248, %s264
    %p266 = scmp.eq.s32.totalorder %s21, 0
    %p267 = por %p265, %p266
    %p268 = scmp.le.s32.totalorder 1, %s15
    %p269 = scmp.lt.s32.totalorder %s15, 3
    %p270 = pnand %p268, %p269
    %p271 = pneg %p270
    // Predicated region
    $region9: #{non_local_block_forward.3} parent=5 // pred_check
      _
    $region10: #{non_local_block_forward.3} parent=5 // pred_check_branch
      %273 = sbr.rel (%p270) target = $region12
    $region11: #{non_local_block_forward.3} parent=5 // pred_region
      %s274 = ssub.s32 %s15, 1
      // Predicated region
      $region13: #{non_local_block_forward.3} parent=11 // pred_check
        %p275 = pneg %p83
      $region14: #{non_local_block_forward.3} parent=11 // pred_check_branch
        %277 = sbr.rel (%p275) target = $region16
      $region15: #{non_local_block_forward.3} parent=11 // pred_region
        _
      $region16: #{non_local_block_forward.3} parent=11 // pred_fallthru
        _
      // Predicated region
      $region17: #{non_local_block_forward.3} parent=11 // pred_check
        %p278 = pneg %p104
      $region18: #{non_local_block_forward.3} parent=11 // pred_check_branch
        %280 = sbr.rel (%p278) target = $region20
      $region19: #{non_local_block_forward.3} parent=11 // pred_region
        _
      $region20: #{non_local_block_forward.3} parent=11 // pred_fallthru
        _
      // Predicated region
      $region21: #{non_local_block_forward.3} parent=11 // pred_check
        %p281 = pneg %p181
      $region22: #{non_local_block_forward.3} parent=11 // pred_check_branch
        %283 = sbr.rel (%p281) target = $region24
      $region23: #{non_local_block_forward.3} parent=11 // pred_region
        _
      $region24: #{non_local_block_forward.3} parent=11 // pred_fallthru
        _
      // Predicated region
      $region25: #{non_local_block_forward.3} parent=11 // pred_check
        %p284 = pneg %p202
      $region26: #{non_local_block_forward.3} parent=11 // pred_check_branch
        %286 = sbr.rel (%p284) target = $region28
      $region27: #{non_local_block_forward.3} parent=11 // pred_region
        _
      $region28: #{non_local_block_forward.3} parent=11 // pred_fallthru
        _
    $region12: #{non_local_block_forward.3} parent=5 // pred_fallthru
      _
    %p287 = scmp.lt.s32.totalorder %s15, 2
    // Predicated region
    $region29: #{non_local_block_forward.3} parent=5 // pred_check
      %p288 = pneg %p287
    $region30: #{non_local_block_forward.3} parent=5 // pred_check_branch
      %290 = sbr.rel (%p288) target = $region32
    $region31: #{non_local_block_forward.3} parent=5 // pred_region
      // Predicated region
      $region33: #{non_local_block_forward.3} parent=31 // pred_check
        %p291 = pneg %p56
      $region34: #{non_local_block_forward.3} parent=31 // pred_check_branch
        %293 = sbr.rel (%p291) target = $region36
      $region35: #{non_local_block_forward.3} parent=31 // pred_region
        %p294 = scmp.lt.s32.totalorder %s22, 1
        %s295 = scalar_select %p294, %s22, 1
        %p296 = scmp.lt.s32.totalorder %s23, 0
        %s297 = scalar_select %p296, %s23, 0
        %s298 = sadd.s32 %s297, %s295
        %s299 = smul.addr %s298, 8
        %s300 = scalar_lea.vmem %s0, %s299
      $region36: #{non_local_block_forward.3} parent=31 // pred_fallthru
        _
      // Predicated region
      $region37: #{non_local_block_forward.3} parent=31 // pred_check
        %p301 = pneg %p126
      $region38: #{non_local_block_forward.3} parent=31 // pred_check_branch
        %303 = sbr.rel (%p301) target = $region40
      $region39: #{non_local_block_forward.3} parent=31 // pred_region
        %p304 = scmp.lt.s32.totalorder %s22, 1
        %s305 = scalar_select %p304, %s22, 1
        %p306 = scmp.lt.s32.totalorder %s24, 0
        %s307 = scalar_select %p306, %s24, 0
        %s308 = sadd.s32 %s307, %s305
        %s309 = smul.addr %s308, 4
        %s310 = scalar_lea.vmem %s3, %s309
      $region40: #{non_local_block_forward.3} parent=31 // pred_fallthru
        _
      // Predicated region
      $region41: #{non_local_block_forward.3} parent=31 // pred_check
        %p311 = pneg %p154
      $region42: #{non_local_block_forward.3} parent=31 // pred_check_branch
        %313 = sbr.rel (%p311) target = $region44
      $region43: #{non_local_block_forward.3} parent=31 // pred_region
        %p314 = scmp.lt.s32.totalorder %s22, 1
        %s315 = scalar_select %p314, %s22, 1
        %p316 = scmp.lt.s32.totalorder %s24, 0
        %s317 = scalar_select %p316, %s24, 0
        %s318 = sadd.s32 %s317, %s315
        %s319 = smul.addr %s318, 4
        %s320 = scalar_lea.vmem %s4, %s319
      $region44: #{non_local_block_forward.3} parent=31 // pred_fallthru
        _
    $region32: #{non_local_block_forward.3} parent=5 // pred_fallthru
      _
    %p321 = scmp.le.s32.totalorder 1, %s15
    %p322 = scmp.lt.s32.totalorder %s15, 3
    %p323 = pnand %p321, %p322
    %p324 = pneg %p323
    // Predicated region
    $region45: #{non_local_block_forward.3} parent=5 // pred_check
      _
    $region46: #{non_local_block_forward.3} parent=5 // pred_check_branch
      %326 = sbr.rel (%p323) target = $region48
    $region47: #{non_local_block_forward.3} parent=5 // pred_region
      %s327 = ssub.s32 %s15, 1
      %p328 = scmp.lt.s32.totalorder %s25, 1
      %s329 = scalar_select %p328, %s25, 1
      %p330 = scmp.lt.s32.totalorder %s26, 0
      %s331 = scalar_select %p330, %s26, 0
      %s332 = sadd.s32 %s331, %s329
      %s333 = smul.addr %s332, 8
      %s334 = scalar_lea.vmem %s0, %s333
      %p335 = pneg %p62
      %p336 = pneg %p59
      %p337 = pneg %p83
      %p338 = pneg %p80
      %p339 = pneg %p104
      %p340 = pneg %p101
      %p341 = scmp.lt.s32.totalorder %s25, 1
      %s342 = scalar_select %p341, %s25, 1
      %p343 = scmp.lt.s32.totalorder %s27, 0
      %s344 = scalar_select %p343, %s27, 0
      %s345 = sadd.s32 %s344, %s342
      %s346 = smul.addr %s345, 4
      %s347 = scalar_lea.vmem %s3, %s346
      %p348 = pneg %p132
      %p349 = pneg %p129
      %p350 = scmp.lt.s32.totalorder %s25, 1
      %s351 = scalar_select %p350, %s25, 1
      %p352 = scmp.lt.s32.totalorder %s27, 0
      %s353 = scalar_select %p352, %s27, 0
      %s354 = sadd.s32 %s353, %s351
      %s355 = smul.addr %s354, 4
      %s356 = scalar_lea.vmem %s4, %s355
      %p357 = pneg %p160
      %p358 = pneg %p157
      %p359 = pneg %p181
      %p360 = pneg %p178
      %p361 = pneg %p202
      %p362 = pneg %p199
      %p363 = pneg %p230
      %p364 = pneg %p227
      %p365 = scmp.lt.s32.totalorder %s25, 1
      %s366 = scalar_select %p365, %s25, 1
      %p367 = scmp.lt.s32.totalorder %s26, 0
      %s368 = scalar_select %p367, %s26, 0
      %s369 = sadd.s32 %s368, %s366
      %s370 = smul.addr %s369, 8
      %s371 = scalar_lea.vmem %s7, %s370
      %p372 = pneg %p260
      %p373 = pneg %p257
      %s374 = smul.u32 16, %s26
      %p375 = scmp.lt.s32.totalorder %s25, 1
      %s376 = scalar_select %p375, %s25, 1
      %p377 = scmp.lt.s32.totalorder %s374, 15
      %s378 = scalar_select %p377, %s374, 15
      %p379 = scmp.lt.s32.totalorder %s27, 0
      %s380 = scalar_select %p379, %s27, 0
      %s381 = sadd.s32 %s380, %s378
      %s382 = smul.addr %s376, 16
      %s383 = sadd.s32 %s381, %s382
      %s384 = smul.addr %s383, 8
      %s385 = scalar_lea.vmem %s8, %s384
      %p386 = scmp.lt.s32.totalorder %s25, 1
      %s387 = scalar_select %p386, %s25, 1
      %p388 = scmp.lt.s32.totalorder %s26, 0
      %s389 = scalar_select %p388, %s26, 0
      %s390 = sadd.s32 %s389, %s387
      %s391 = smul.addr %s390, 8
      %s392 = scalar_lea.vmem %s0, %s391
      %p393 = scmp.lt.s32.totalorder %s25, 1
      %s394 = scalar_select %p393, %s25, 1
      %p395 = scmp.lt.s32.totalorder %s27, 0
      %s396 = scalar_select %p395, %s27, 0
      %s397 = sadd.s32 %s396, %s394
      %s398 = smul.addr %s397, 4
      %s399 = scalar_lea.vmem %s3, %s398
      %p400 = scmp.lt.s32.totalorder %s25, 1
      %s401 = scalar_select %p400, %s25, 1
      %p402 = scmp.lt.s32.totalorder %s27, 0
      %s403 = scalar_select %p402, %s27, 0
      %s404 = sadd.s32 %s403, %s401
      %s405 = smul.addr %s404, 4
      %s406 = scalar_lea.vmem %s4, %s405
      %p407 = scmp.lt.s32.totalorder %s25, 1
      %s408 = scalar_select %p407, %s25, 1
      %p409 = scmp.lt.s32.totalorder %s26, 0
      %s410 = scalar_select %p409, %s26, 0
      %s411 = sadd.s32 %s410, %s408
      %s412 = smul.addr %s411, 8
      %s413 = scalar_lea.vmem %s7, %s412
      %s414 = smul.u32 16, %s26
      %p415 = scmp.lt.s32.totalorder %s25, 1
      %s416 = scalar_select %p415, %s25, 1
      %p417 = scmp.lt.s32.totalorder %s414, 15
      %s418 = scalar_select %p417, %s414, 15
      %p419 = scmp.lt.s32.totalorder %s27, 0
      %s420 = scalar_select %p419, %s27, 0
      %s421 = sadd.s32 %s420, %s418
      %s422 = smul.addr %s416, 16
      %s423 = sadd.s32 %s421, %s422
      %s424 = smul.addr %s423, 8
      %s425 = scalar_lea.vmem %s8, %s424
      %s426 = smul.u32 16, %s26
      %p427 = scmp.eq.s32.totalorder %s27, 0
      // Predicated region
      $region49: #{non_local_block_forward.3} parent=47 // pred_check
        %p428 = pneg %p427
      $region50: #{non_local_block_forward.3} parent=47 // pred_check_branch
        %430 = sbr.rel (%p428) target = $region52
      $region51: #{non_local_block_forward.3} parent=47 // pred_region
        %v431 = vld [vmem:[%s392] sm:$0xff]
        %v432 = vld [vmem:[%s1] sm:$0xf]
        %v433 = vld [vmem:[%s2] sm:$0xf]
        %435 = vset.pattern.permute.xlu0 0
        %436 = vperm.xlu0 %435, %v433
        %v437 = vpop.permute.xlu0 %436
        %vm439 = vcmask 64512
        %v441 = vsel %vm439, %v432, 0
        %443 = vmatpush.msra.mxu0 0.0
        %444 = vmatpush.msra.mxu0 0.0
        %445 = vmatpush.msra.mxu0 0.0
        %446 = vmatpush.msra.mxu0 0.0
        %447 = vmatpush.msra.mxu0 0.0
        %448 = vmatpush.msra.mxu0 0.0
        %449 = vmatpush.msra.mxu0 0.0
        %450 = vmatpush.msra.mxu0 0.0
        %451 = vmatpush.msra.mxu0 0.0
        %452 = vmatpush.msra.mxu0 0.0
        %453 = vmatpush.msra.mxu0 0.0
        %454 = vmatpush.msra.mxu0 0.0
        %455 = vmatpush.msra.mxu0 0.0
        %456 = vmatpush.msra.mxu0 0.0
        %457 = vmatpush.msra.mxu0 0.0
        %458 = vmatpush.msra.mxu0 %v431
        %459 = vmatmul.f32.gmra.mxu0 %v441
        %v460 = vpop.f32.mrf.mxu0
        %v461 = vadd.f32 %v437, %v460
        %462 = vdwg.mxu0
        %463 = vst [vmem:[#allocation2] sm:$0xf] %v461
        %464 = vst [vmem:[#allocation3] sm:$0xf] 0.0
      $region52: #{non_local_block_forward.3} parent=47 // pred_fallthru
        _
      %v465 = vld [vmem:[#allocation2] sm:$0xf]
      %v466 = vld [vmem:[%s399] sm:$0xf]
      %467 = vxpose.xlu0.b32.start [1/16] %v465, 128
      %468 = vxpose.xlu0.b32.cont [2/16] 0.0, 128
      %469 = vxpose.xlu0.b32.cont [3/16] 0.0, 128
      %470 = vxpose.xlu0.b32.cont [4/16] 0.0, 128
      %471 = vxpose.xlu0.b32.cont [5/16] 0.0, 128
      %472 = vxpose.xlu0.b32.cont [6/16] 0.0, 128
      %473 = vxpose.xlu0.b32.cont [7/16] 0.0, 128
      %474 = vxpose.xlu0.b32.cont [8/16] 0.0, 128
      %475 = vxpose.xlu0.b32.cont [9/16] 0.0, 128
      %476 = vxpose.xlu0.b32.cont [10/16] 0.0, 128
      %477 = vxpose.xlu0.b32.cont [11/16] 0.0, 128
      %478 = vxpose.xlu0.b32.cont [12/16] 0.0, 128
      %479 = vxpose.xlu0.b32.cont [13/16] 0.0, 128
      %480 = vxpose.xlu0.b32.cont [14/16] 0.0, 128
      %481 = vxpose.xlu0.b32.cont [15/16] 0.0, 128
      %482 = vxpose.xlu0.b32.end [16/16] 0.0, 128
      %v483 = vpop.trf.xlu0
      %v484 = vpop.trf.xlu0
      %v485 = vpop.trf.xlu0
      %v486 = vpop.trf.xlu0
      %v487 = vpop.trf.xlu0
      %v488 = vpop.trf.xlu0
      %v489 = vpop.trf.xlu0
      %v490 = vpop.trf.xlu0
      %v491 = vpop.trf.xlu0
      %v492 = vpop.trf.xlu0
      %v493 = vpop.trf.xlu0
      %v494 = vpop.trf.xlu0
      %v495 = vpop.trf.xlu0
      %v496 = vpop.trf.xlu0
      %v497 = vpop.trf.xlu0
      %v498 = vpop.trf.xlu0
      %vm499 = vcmask 31744
      %v501 = vsel %vm499, %v483, 0
      %v504 = vsel %vm499, %v484, 0
      %v507 = vsel %vm499, %v485, 0
      %v510 = vsel %vm499, %v486, 0
      %v513 = vsel %vm499, %v487, 0
      %v516 = vsel %vm499, %v488, 0
      %v519 = vsel %vm499, %v489, 0
      %v522 = vsel %vm499, %v490, 0
      %v525 = vsel %vm499, %v491, 0
      %v528 = vsel %vm499, %v492, 0
      %v531 = vsel %vm499, %v493, 0
      %v534 = vsel %vm499, %v494, 0
      %v537 = vsel %vm499, %v495, 0
      %v540 = vsel %vm499, %v496, 0
      %v543 = vsel %vm499, %v497, 0
      %v546 = vsel %vm499, %v498, 0
      %vm548 = vcmask 1043456
      %v550 = vsel %vm548, %v466, 0
      %552 = vmatpush.msra.mxu0 0.0
      %553 = vmatpush.msra.mxu0 0.0
      %554 = vmatpush.msra.mxu0 0.0
      %555 = vmatpush.msra.mxu0 0.0
      %556 = vmatpush.msra.mxu0 0.0
      %557 = vmatpush.msra.mxu0 0.0
      %558 = vmatpush.msra.mxu0 0.0
      %559 = vmatpush.msra.mxu0 0.0
      %560 = vmatpush.msra.mxu0 0.0
      %561 = vmatpush.msra.mxu0 0.0
      %562 = vmatpush.msra.mxu0 0.0
      %563 = vmatpush.msra.mxu0 0.0
      %564 = vmatpush.msra.mxu0 0.0
      %565 = vmatpush.msra.mxu0 0.0
      %566 = vmatpush.msra.mxu0 0.0
      %567 = vmatpush.msra.mxu0 %v550
      %568 = vmatmul.f32.gmra.mxu0 %v501
      %v569 = vpop.f32.mrf.mxu0
      %v570 = vadd.f32 0.0, %v569
      %571 = vmatmul.f32.gmra.mxu0 %v504
      %v572 = vpop.f32.mrf.mxu0
      %v573 = vadd.f32 0.0, %v572
      %574 = vmatmul.f32.gmra.mxu0 %v507
      %v575 = vpop.f32.mrf.mxu0
      %v576 = vadd.f32 0.0, %v575
      %577 = vmatmul.f32.gmra.mxu0 %v510
      %v578 = vpop.f32.mrf.mxu0
      %v579 = vadd.f32 0.0, %v578
      %580 = vmatmul.f32.gmra.mxu0 %v513
      %v581 = vpop.f32.mrf.mxu0
      %v582 = vadd.f32 0.0, %v581
      %583 = vmatmul.f32.gmra.mxu0 %v516
      %v584 = vpop.f32.mrf.mxu0
      %v585 = vadd.f32 0.0, %v584
      %586 = vmatmul.f32.gmra.mxu0 %v519
      %v587 = vpop.f32.mrf.mxu0
      %v588 = vadd.f32 0.0, %v587
      %589 = vmatmul.f32.gmra.mxu0 %v522
      %v590 = vpop.f32.mrf.mxu0
      %v591 = vadd.f32 0.0, %v590
      %592 = vmatmul.f32.gmra.mxu0 %v525
      %v593 = vpop.f32.mrf.mxu0
      %v594 = vadd.f32 0.0, %v593
      %595 = vmatmul.f32.gmra.mxu0 %v528
      %v596 = vpop.f32.mrf.mxu0
      %v597 = vadd.f32 0.0, %v596
      %598 = vmatmul.f32.gmra.mxu0 %v531
      %v599 = vpop.f32.mrf.mxu0
      %v600 = vadd.f32 0.0, %v599
      %601 = vmatmul.f32.gmra.mxu0 %v534
      %v602 = vpop.f32.mrf.mxu0
      %v603 = vadd.f32 0.0, %v602
      %604 = vmatmul.f32.gmra.mxu0 %v537
      %v605 = vpop.f32.mrf.mxu0
      %v606 = vadd.f32 0.0, %v605
      %607 = vmatmul.f32.gmra.mxu0 %v540
      %v608 = vpop.f32.mrf.mxu0
      %v609 = vadd.f32 0.0, %v608
      %610 = vmatmul.f32.gmra.mxu0 %v543
      %v611 = vpop.f32.mrf.mxu0
      %v612 = vadd.f32 0.0, %v611
      %613 = vmatmul.f32.gmra.mxu0 %v546
      %v614 = vpop.f32.mrf.mxu0
      %v615 = vadd.f32 0.0, %v614
      %616 = vdwg.mxu0
      %v617 = vmul.f32 %v570, 0.03125
      %v618 = vmul.f32 %v573, 0.03125
      %v619 = vmul.f32 %v576, 0.03125
      %v620 = vmul.f32 %v579, 0.03125
      %v621 = vmul.f32 %v582, 0.03125
      %v622 = vmul.f32 %v585, 0.03125
      %v623 = vmul.f32 %v588, 0.03125
      %v624 = vmul.f32 %v591, 0.03125
      %v625 = vmul.f32 %v594, 0.03125
      %v626 = vmul.f32 %v597, 0.03125
      %v627 = vmul.f32 %v600, 0.03125
      %v628 = vmul.f32 %v603, 0.03125
      %v629 = vmul.f32 %v606, 0.03125
      %v630 = vmul.f32 %v609, 0.03125
      %v631 = vmul.f32 %v612, 0.03125
      %v632 = vmul.f32 %v615, 0.03125
      %vm633 = vcmask 261120
      %634 = vst.msk [vmem:[%s425] sm:$0xff] %vm633, %v617
      %635 = vst.msk [vmem:[%s425 + $0x8] sm:$0xff] %vm633, %v618
      %636 = vst.msk [vmem:[%s425 + $0x10] sm:$0xff] %vm633, %v619
      %637 = vst.msk [vmem:[%s425 + $0x18] sm:$0xff] %vm633, %v620
      %638 = vst.msk [vmem:[%s425 + $0x20] sm:$0xff] %vm633, %v621
      %639 = vst.msk [vmem:[%s425 + $0x28] sm:$0xff] %vm633, %v622
      %640 = vst.msk [vmem:[%s425 + $0x30] sm:$0xff] %vm633, %v623
      %641 = vst.msk [vmem:[%s425 + $0x38] sm:$0xff] %vm633, %v624
      %642 = vst.msk [vmem:[%s425 + $0x40] sm:$0xff] %vm633, %v625
      %643 = vst.msk [vmem:[%s425 + $0x48] sm:$0xff] %vm633, %v626
      %644 = vst.msk [vmem:[%s425 + $0x50] sm:$0xff] %vm633, %v627
      %645 = vst.msk [vmem:[%s425 + $0x58] sm:$0xff] %vm633, %v628
      %646 = vst.msk [vmem:[%s425 + $0x60] sm:$0xff] %vm633, %v629
      %647 = vst.msk [vmem:[%s425 + $0x68] sm:$0xff] %vm633, %v630
      %648 = vst.msk [vmem:[%s425 + $0x70] sm:$0xff] %vm633, %v631
      %649 = vst.msk [vmem:[%s425 + $0x78] sm:$0xff] %vm633, %v632
      %v650 = vld [vmem:[#allocation3] sm:$0xf]
      %v651 = vld [vmem:[%s406] sm:$0xf]
      %v653 = vsel %vm633, %v651, 0
      %v656 = vsel %vm633, %v617, 0
      %v659 = vsel %vm633, %v618, 0
      %v662 = vsel %vm633, %v619, 0
      %v665 = vsel %vm633, %v620, 0
      %v668 = vsel %vm633, %v621, 0
      %v671 = vsel %vm633, %v622, 0
      %v674 = vsel %vm633, %v623, 0
      %v677 = vsel %vm633, %v624, 0
      %v680 = vsel %vm633, %v625, 0
      %v683 = vsel %vm633, %v626, 0
      %v686 = vsel %vm633, %v627, 0
      %v689 = vsel %vm633, %v628, 0
      %v692 = vsel %vm633, %v629, 0
      %v695 = vsel %vm633, %v630, 0
      %v698 = vsel %vm633, %v631, 0
      %v701 = vsel %vm633, %v632, 0
      %703 = vmatpush.xpose.msra.mxu0 %v701
      %704 = vmatpush.xpose.msra.mxu0 %v698
      %705 = vmatpush.xpose.msra.mxu0 %v695
      %706 = vmatpush.xpose.msra.mxu0 %v692
      %707 = vmatpush.xpose.msra.mxu0 %v689
      %708 = vmatpush.xpose.msra.mxu0 %v686
      %709 = vmatpush.xpose.msra.mxu0 %v683
      %710 = vmatpush.xpose.msra.mxu0 %v680
      %711 = vmatpush.xpose.msra.mxu0 %v677
      %712 = vmatpush.xpose.msra.mxu0 %v674
      %713 = vmatpush.xpose.msra.mxu0 %v671
      %714 = vmatpush.xpose.msra.mxu0 %v668
      %715 = vmatpush.xpose.msra.mxu0 %v665
      %716 = vmatpush.xpose.msra.mxu0 %v662
      %717 = vmatpush.xpose.msra.mxu0 %v659
      %718 = vmatpush.xpose.msra.mxu0 %v656
      %719 = vmatmul.f32.gmra.mxu0 %v653
      %v720 = vpop.f32.mrf.mxu0
      %v721 = vadd.f32 0.0, %v720
      %722 = vdwg.mxu0
      %v723 = vadd.f32 %v650, %v721
      %724 = vst [vmem:[#allocation3] sm:$0xf] %v723
      // Predicated region
      $region53: #{non_local_block_forward.3} parent=47 // pred_check
        %p725 = pneg %p427
      $region54: #{non_local_block_forward.3} parent=47 // pred_check_branch
        %727 = sbr.rel (%p725) target = $region56
      $region55: #{non_local_block_forward.3} parent=47 // pred_region
        %v728 = vld [vmem:[%s5] sm:$0xff]
        %v729 = vld [vmem:[#allocation3] sm:$0xf]
        %v730 = vld [vmem:[%s6] sm:$0xff]
        %732 = vset.pattern.permute.xlu0 0
        %733 = vperm.xlu0 %732, %v730
        %v734 = vpop.permute.xlu0 %733
        %v737 = vsel %vm499, %v728, 0
        %v740 = vsel %vm548, %v729, 0
        %742 = vmatpush.msra.mxu0 0.0
        %743 = vmatpush.msra.mxu0 0.0
        %744 = vmatpush.msra.mxu0 0.0
        %745 = vmatpush.msra.mxu0 0.0
        %746 = vmatpush.msra.mxu0 0.0
        %747 = vmatpush.msra.mxu0 0.0
        %748 = vmatpush.msra.mxu0 0.0
        %749 = vmatpush.msra.mxu0 0.0
        %750 = vmatpush.msra.mxu0 0.0
        %751 = vmatpush.msra.mxu0 0.0
        %752 = vmatpush.msra.mxu0 0.0
        %753 = vmatpush.msra.mxu0 0.0
        %754 = vmatpush.msra.mxu0 0.0
        %755 = vmatpush.msra.mxu0 0.0
        %756 = vmatpush.msra.mxu0 0.0
        %757 = vmatpush.msra.mxu0 %v740
        %758 = vmatmul.f32.gmra.mxu0 %v737
        %v759 = vpop.f32.mrf.mxu0
        %v760 = vadd.f32 %v734, %v759
        %761 = vdwg.mxu0
        %v762 = vld [vmem:[%s392] sm:$0xff]
        %v763 = vadd.f32 %v760, %v762
        %764 = vst [vmem:[%s413] sm:$0xff] %v763
      $region56: #{non_local_block_forward.3} parent=47 // pred_fallthru
        _
      %p765 = scmp.lt.s32.totalorder %s25, 1
      %s766 = scalar_select %p765, %s25, 1
      %p767 = scmp.lt.s32.totalorder %s26, 0
      %s768 = scalar_select %p767, %s26, 0
      %s769 = sadd.s32 %s768, %s766
      %s770 = smul.addr %s769, 8
      %s771 = scalar_lea.vmem %s7, %s770
      %s772 = smul.u32 16, %s26
      %p773 = scmp.lt.s32.totalorder %s25, 1
      %s774 = scalar_select %p773, %s25, 1
      %p775 = scmp.lt.s32.totalorder %s772, 15
      %s776 = scalar_select %p775, %s772, 15
      %p777 = scmp.lt.s32.totalorder %s27, 0
      %s778 = scalar_select %p777, %s27, 0
      %s779 = sadd.s32 %s778, %s776
      %s780 = smul.addr %s774, 16
      %s781 = sadd.s32 %s779, %s780
      %s782 = smul.addr %s781, 8
      %s783 = scalar_lea.vmem %s8, %s782
      // Predicated region
      $region57: #{non_local_block_forward.3} parent=47 // pred_check
        %p784 = pneg %p227
      $region58: #{non_local_block_forward.3} parent=47 // pred_check_branch
        %786 = sbr.rel (%p784) target = $region60
      $region59: #{non_local_block_forward.3} parent=47 // pred_region
        _
      $region60: #{non_local_block_forward.3} parent=47 // pred_fallthru
        _
      // Predicated region
      $region61: #{non_local_block_forward.3} parent=47 // pred_check
        %p787 = pneg %p257
      $region62: #{non_local_block_forward.3} parent=47 // pred_check_branch
        %789 = sbr.rel (%p787) target = $region64
      $region63: #{non_local_block_forward.3} parent=47 // pred_region
        %s790 = smul.u32 16, %s26
      $region64: #{non_local_block_forward.3} parent=47 // pred_fallthru
        _
    $region48: #{non_local_block_forward.3} parent=5 // pred_fallthru
      _
    %p791 = scmp.le.s32.totalorder 2, %s15
    // Predicated region
    $region65: #{non_local_block_forward.3} parent=5 // pred_check
      %p792 = pneg %p791
    $region66: #{non_local_block_forward.3} parent=5 // pred_check_branch
      %794 = sbr.rel (%p792) target = $region68
    $region67: #{non_local_block_forward.3} parent=5 // pred_region
      %s795 = ssub.s32 %s15, 2
      // Predicated region
      $region69: #{non_local_block_forward.3} parent=67 // pred_check
        %p796 = pneg %p233
      $region70: #{non_local_block_forward.3} parent=67 // pred_check_branch
        %798 = sbr.rel (%p796) target = $region72
      $region71: #{non_local_block_forward.3} parent=67 // pred_region
        %p799 = scmp.lt.s32.totalorder %s28, 1
        %s800 = scalar_select %p799, %s28, 1
        %p801 = scmp.lt.s32.totalorder %s29, 0
        %s802 = scalar_select %p801, %s29, 0
        %s803 = sadd.s32 %s802, %s800
        %s804 = smul.addr %s803, 8
        %s805 = scalar_lea.vmem %s7, %s804
      $region72: #{non_local_block_forward.3} parent=67 // pred_fallthru
        _
      // Predicated region
      $region73: #{non_local_block_forward.3} parent=67 // pred_check
        %p806 = pneg %p263
      $region74: #{non_local_block_forward.3} parent=67 // pred_check_branch
        %808 = sbr.rel (%p806) target = $region76
      $region75: #{non_local_block_forward.3} parent=67 // pred_region
        %s809 = smul.u32 16, %s29
        %p810 = scmp.lt.s32.totalorder %s28, 1
        %s811 = scalar_select %p810, %s28, 1
        %p812 = scmp.lt.s32.totalorder %s809, 15
        %s813 = scalar_select %p812, %s809, 15
        %p814 = scmp.lt.s32.totalorder %s30, 0
        %s815 = scalar_select %p814, %s30, 0
        %s816 = sadd.s32 %s815, %s813
        %s817 = smul.addr %s811, 16
        %s818 = sadd.s32 %s816, %s817
        %s819 = smul.addr %s818, 8
        %s820 = scalar_lea.vmem %s8, %s819
      $region76: #{non_local_block_forward.3} parent=67 // pred_fallthru
        _
    $region68: #{non_local_block_forward.3} parent=5 // pred_fallthru
      _
  $region6: #{non_local_block_forward.3} parent=0 // loop_footer
    %s19 = sadd.s32 1, %s15
  $region7: #{non_local_block_forward.3} parent=0 // loop_footer_branch
    %14 = sbr.rel target = $region3
  $region8: #{non_local_block_forward.3} parent=0 // loop_exit
    _

</llo_original>
